<compile_context>
chip_gen: v7x
topology: tpu7x:2x2x1
jax: 0.10.0
libtpu: 0.0.40
codegen_flags: <defaults>
</compile_context>

<pallas_src>
import jax
import jax.numpy as jnp
from jax.experimental import pallas as pl
from jax.experimental.pallas import tpu as pltpu

# ----------------------------- config (small) ------------------------------
SEQ = 16
HIDDEN = 128
NUM_HEADS = 4
NUM_KV_HEADS = 2
HEAD_DIM = HIDDEN // NUM_HEADS                 # 32
HALF = HEAD_DIM // 2                           # 16
GROUP = NUM_HEADS // NUM_KV_HEADS              # 2
Q_SIZE = NUM_HEADS * HEAD_DIM                  # 128  (lane-dense)
KV_SIZE = NUM_KV_HEADS * HEAD_DIM              # 64
QKV_SIZE = Q_SIZE + 2 * KV_SIZE                # 256  (lane-dense)
TOTAL_HEADS = NUM_HEADS + 2 * NUM_KV_HEADS     # 8 (q heads, k heads, v heads)
SCALING = HEAD_DIM ** -0.5
ROPE_THETA = 10000.0
NEG_BIG = -1e30


# ------------------------------ kernel body --------------------------------
def llama_attention_kernel(x_ref, cos_ref, sin_ref, w_big_ref, wo_ref, out_ref):
    bf16 = jnp.bfloat16

    # Single fused projection: [q | k | v | q_swap | k_swap | 0] in one
    # lane-dense 512-wide bf16 matmul (fills the 2x256 MXU); f32 accumulation.
    slab = jnp.dot(x_ref[...], w_big_ref[...],
                   preferred_element_type=jnp.float32)          # (SEQ, 512)
    base = slab[:, :QKV_SIZE]                                    # (SEQ, 256)
    swap = slab[:, QKV_SIZE:]                                    # (SEQ, 256)

    # RoPE (neox) with the rotate-half permutation folded into the weights:
    # roped = base * cos + swap * sin_signed.  cos/sin are 1/0 over the V
    # lanes, so V passes through untouched.  All in f32.
    roped = base * cos_ref[...] + swap * sin_ref[...]            # (SEQ, 256)

    # Head-major layout; slice q/k/v along the cheap leading axis.
    heads = pltpu.einshape(
        "shd->hsd", roped.reshape(SEQ, TOTAL_HEADS, HEAD_DIM))   # (8, SEQ, D)
    qh = heads[:NUM_HEADS]                                       # (4, SEQ, D)
    kh = heads[NUM_HEADS:NUM_HEADS + NUM_KV_HEADS]               # (2, SEQ, D)
    vh = heads[NUM_HEADS + NUM_KV_HEADS:]                        # (2, SEQ, D)

    # GQA: group query heads by their KV head (no K/V broadcast copies);
    # query head h uses kv head h // GROUP, so qg[g] rows = heads 2g, 2g+1.
    qg = qh.reshape(NUM_KV_HEADS, GROUP * SEQ, HEAD_DIM)         # (2, 32, D)

    # Scores contract the last dim of both operands (no K transpose).
    scores = jnp.einsum("gqd,gkd->gqk", qg.astype(bf16), kh.astype(bf16),
                        preferred_element_type=jnp.float32) * SCALING

    # Causal mask as an additive f32 bias; grouped row index maps to sequence
    # position via (row % SEQ).
    r = jax.lax.broadcasted_iota(jnp.int32, (GROUP * SEQ, SEQ), 0) % SEQ
    c = jax.lax.broadcasted_iota(jnp.int32, (GROUP * SEQ, SEQ), 1)
    scores = scores + jnp.where(r >= c, 0.0, NEG_BIG)[None]

    m = jnp.max(scores, axis=-1, keepdims=True)
    p = jnp.exp(scores - m)
    p = p * pl.reciprocal(jnp.sum(p, axis=-1, keepdims=True), approx=True)

    ctx = jnp.einsum("gqk,gkd->gqd", p.astype(bf16), vh.astype(bf16),
                     preferred_element_type=jnp.float32)         # (2, 32, D)
    ctx_h = ctx.reshape(NUM_HEADS, SEQ, HEAD_DIM)                # (4, SEQ, D)
    attn = pltpu.einshape("hqd->qhd", ctx_h).reshape(SEQ, Q_SIZE)  # lane-dense

    out_ref[...] = jnp.dot(attn.astype(bf16), wo_ref[...],
                           preferred_element_type=jnp.float32)


# ------------------------------ host wrapper -------------------------------
def _swap_perm(width):
    """Column permutation implementing neox rotate-half inside each head."""
    idx = jnp.arange(width)
    head = idx // HEAD_DIM
    within = idx % HEAD_DIM
    return head * HEAD_DIM + (within + HALF) % HEAD_DIM


def _rope_tables(positions):
    inv_freq = 1.0 / (ROPE_THETA ** (
        jnp.arange(0, HEAD_DIM, 2, dtype=jnp.float32) / HEAD_DIM))
    freqs = positions.astype(jnp.float32)[:, None] * inv_freq[None, :]
    cos, sin = jnp.cos(freqs), jnp.sin(freqs)                    # (S, HALF)
    cos_h = jnp.concatenate([cos, cos], axis=-1)                 # (S, HEAD_DIM)
    sin_h = jnp.concatenate([-sin, sin], axis=-1)                # signed for swap fold
    s = positions.shape[0]
    cos_all = jnp.concatenate(
        [jnp.tile(cos_h, (1, NUM_HEADS)),                        # q lanes
         jnp.tile(cos_h, (1, NUM_KV_HEADS)),                     # k lanes
         jnp.ones((s, KV_SIZE), jnp.float32)], axis=-1)          # v lanes pass-through
    sin_all = jnp.concatenate(
        [jnp.tile(sin_h, (1, NUM_HEADS)),
         jnp.tile(sin_h, (1, NUM_KV_HEADS)),
         jnp.zeros((s, KV_SIZE), jnp.float32)], axis=-1)
    return cos_all, sin_all                                      # (S, 256) each


@jax.jit
def llama_attention(positions, hidden_states, params):
    """positions: (S,) int32; hidden_states: (S, H) f32.  Returns (S, H) f32."""
    s, h = hidden_states.shape
    cos_all, sin_all = _rope_tables(positions)

    w_qkv = params["w_qkv"]
    wq = w_qkv[:, :Q_SIZE]
    wk = w_qkv[:, Q_SIZE:Q_SIZE + KV_SIZE]
    wv = w_qkv[:, Q_SIZE + KV_SIZE:]
    # Fold the rotate-half permutation into pre-permuted weight columns and
    # fuse all projections into one (HIDDEN, 512) bf16 weight.
    w_base = jnp.concatenate([wq, wk, wv], axis=1)               # (H, 256)
    w_swap = jnp.concatenate([wq[:, _swap_perm(Q_SIZE)],
                              wk[:, _swap_perm(KV_SIZE)],
                              jnp.zeros_like(wv)], axis=1)       # (H, 256)
    w_big = jnp.concatenate([w_base, w_swap], axis=1).astype(jnp.bfloat16)
    wo = params["w_o"].astype(jnp.bfloat16)
    x16 = hidden_states.astype(jnp.bfloat16)                     # cast once, host side

    flops = (2 * s * h * 2 * QKV_SIZE                            # fused projection
             + 2 * 2 * NUM_KV_HEADS * GROUP * s * s * HEAD_DIM   # qk^T + pv
             + 2 * s * Q_SIZE * h)                               # o proj
    bytes_accessed = (x16.size * 2 + cos_all.size * 4 + sin_all.size * 4
                      + w_big.size * 2 + wo.size * 2 + s * h * 4)

    return pl.pallas_call(
        llama_attention_kernel,
        out_shape=jax.ShapeDtypeStruct((s, h), jnp.float32),
        cost_estimate=pl.CostEstimate(flops=flops,
                                      transcendentals=NUM_HEADS * s * s,
                                      bytes_accessed=bytes_accessed),
    )(x16, cos_all, sin_all, w_big, wo)


# --------------------------- pure-JAX reference ----------------------------
def reference(positions, hidden_states, params):
    """Mirrors the kernel's precision policy (bf16 MXU inputs, f32 accumulation);
    differs only in exact vs. approximate softmax reciprocal."""
    bf16 = jnp.bfloat16
    s = hidden_states.shape[0]
    inv_freq = 1.0 / (ROPE_THETA ** (
        jnp.arange(0, HEAD_DIM, 2, dtype=jnp.float32) / HEAD_DIM))
    freqs = positions.astype(jnp.float32)[:, None] * inv_freq[None, :]
    cos, sin = jnp.cos(freqs), jnp.sin(freqs)                    # (S, HALF)

    w_qkv = params["w_qkv"]
    wq = w_qkv[:, :Q_SIZE].astype(bf16)
    wk = w_qkv[:, Q_SIZE:Q_SIZE + KV_SIZE].astype(bf16)
    wv = w_qkv[:, Q_SIZE + KV_SIZE:].astype(bf16)
    wo = params["w_o"].astype(bf16)

    x16 = hidden_states.astype(bf16)
    q = jnp.dot(x16, wq, preferred_element_type=jnp.float32)
    k = jnp.dot(x16, wk, preferred_element_type=jnp.float32)
    v = jnp.dot(x16, wv, preferred_element_type=jnp.float32)

    def rope(t):
        n = t.shape[-1] // HEAD_DIM
        t3 = t.reshape(s, n, HEAD_DIM)
        t1, t2 = t3[..., :HALF], t3[..., HALF:]
        c_, s_ = cos[:, None, :], sin[:, None, :]
        return jnp.concatenate([t1 * c_ - t2 * s_, t2 * c_ + t1 * s_],
                               axis=-1).reshape(s, n * HEAD_DIM)

    q, k = rope(q), rope(k)
    q3 = q.reshape(s, NUM_HEADS, HEAD_DIM)
    k3 = jnp.repeat(k.reshape(s, NUM_KV_HEADS, HEAD_DIM), GROUP, axis=1)
    v3 = jnp.repeat(v.reshape(s, NUM_KV_HEADS, HEAD_DIM), GROUP, axis=1)

    scores = jnp.einsum("qhd,khd->hqk", q3.astype(bf16), k3.astype(bf16),
                        preferred_element_type=jnp.float32) * SCALING
    mask = jnp.tril(jnp.ones((s, s), bool))
    scores = jnp.where(mask[None], scores, -jnp.inf)
    p = jax.nn.softmax(scores, axis=-1)
    ctx = jnp.einsum("hqk,khd->qhd", p.astype(bf16), v3.astype(bf16),
                     preferred_element_type=jnp.float32).reshape(s, Q_SIZE)
    return jnp.dot(ctx.astype(bf16), wo, preferred_element_type=jnp.float32)


# ---------------------------------- main ------------------------------------
if __name__ == "__main__":
    key = jax.random.PRNGKey(0)
    k0, k1, k2 = jax.random.split(key, 3)
    scale = 0.05
    params = {
        "w_qkv": scale * jax.random.normal(
            k0, (HIDDEN, Q_SIZE + 2 * KV_SIZE), jnp.float32),
        "w_o": scale * jax.random.normal(k1, (Q_SIZE, HIDDEN), jnp.float32),
    }
    positions = jnp.arange(SEQ, dtype=jnp.int32)
    hidden_states = jax.random.normal(k2, (SEQ, HIDDEN), jnp.float32)

    out = llama_attention(positions, hidden_states, params)
    jax.block_until_ready(out)

    ref = reference(positions, hidden_states, params)
    assert jnp.allclose(out, ref, atol=5e-3, rtol=5e-3), (
        f"mismatch, max abs diff {jnp.max(jnp.abs(out - ref))}")

    # TODO(synk): KV-cache write/read, InputMetadata paging, and the status==1
    # `imp_token_indices` cache-fuse path are not modeled; this kernel covers
    # the standard prefill causal-attention path (status=0, tp_size=1).
    print("KERNEL_OK")
</pallas_src>

<mosaic_0001>
module attributes {stable_mosaic.version = 11 : i64} {
  func.func @llama_attention_kernel(%arg0: memref<16x128xbf16, #tpu.memory_space<vmem>>, %arg1: memref<16x256xf32, #tpu.memory_space<vmem>>, %arg2: memref<16x256xf32, #tpu.memory_space<vmem>>, %arg3: memref<128x512xbf16, #tpu.memory_space<vmem>>, %arg4: memref<128x128xbf16, #tpu.memory_space<vmem>>, %arg5: memref<16x128xf32, #tpu.memory_space<vmem>>) attributes {dimension_semantics = [], scalar_prefetch = 0 : i64, scratch_operands = 0 : i64, tpu.core_type = #tpu.core_type<tc>} {
    %c0 = arith.constant 0 : index
    %c0_0 = arith.constant 0 : index
    %0 = vector.load %arg0[%c0, %c0_0] : memref<16x128xbf16, #tpu.memory_space<vmem>>, vector<16x128xbf16>
    %c0_1 = arith.constant 0 : index
    %c0_2 = arith.constant 0 : index
    %1 = vector.load %arg3[%c0_1, %c0_2] : memref<128x512xbf16, #tpu.memory_space<vmem>>, vector<128x512xbf16>
    %cst = arith.constant dense<0.000000e+00> : vector<16x512xf32>
    %2 = tpu.matmul %0, %1, %cst {dimension_numbers = #tpu.dot_dimension_numbers<[1], [0], [0], [1], [0, 0, 1, 1], [], []>} : vector<16x128xbf16>, vector<128x512xbf16>, vector<16x512xf32> -> vector<16x512xf32>
    %3 = vector.extract_strided_slice %2 {offsets = [0, 0], sizes = [16, 256], strides = [1, 1]} : vector<16x512xf32> to vector<16x256xf32>
    %4 = vector.extract_strided_slice %2 {offsets = [0, 256], sizes = [16, 256], strides = [1, 1]} : vector<16x512xf32> to vector<16x256xf32>
    %c0_3 = arith.constant 0 : index
    %c0_4 = arith.constant 0 : index
    %5 = vector.load %arg1[%c0_3, %c0_4] : memref<16x256xf32, #tpu.memory_space<vmem>>, vector<16x256xf32>
    %6 = arith.mulf %3, %5 : vector<16x256xf32>
    %c0_5 = arith.constant 0 : index
    %c0_6 = arith.constant 0 : index
    %7 = vector.load %arg2[%c0_5, %c0_6] : memref<16x256xf32, #tpu.memory_space<vmem>>, vector<16x256xf32>
    %8 = arith.mulf %4, %7 : vector<16x256xf32>
    %9 = arith.addf %6, %8 : vector<16x256xf32>
    %10 = vector.shape_cast %9 : vector<16x256xf32> to vector<16x8x32xf32>
    %11 = tpu.transpose %10, [1, 0, 2] : vector<16x8x32xf32> -> vector<8x16x32xf32>
    %12 = vector.extract_strided_slice %11 {offsets = [0, 0, 0], sizes = [4, 16, 32], strides = [1, 1, 1]} : vector<8x16x32xf32> to vector<4x16x32xf32>
    %13 = vector.extract_strided_slice %11 {offsets = [4, 0, 0], sizes = [2, 16, 32], strides = [1, 1, 1]} : vector<8x16x32xf32> to vector<2x16x32xf32>
    %14 = vector.extract_strided_slice %11 {offsets = [6, 0, 0], sizes = [2, 16, 32], strides = [1, 1, 1]} : vector<8x16x32xf32> to vector<2x16x32xf32>
    %15 = vector.shape_cast %12 : vector<4x16x32xf32> to vector<2x32x32xf32>
    %16 = arith.truncf %15 : vector<2x32x32xf32> to vector<2x32x32xbf16>
    %17 = arith.truncf %13 : vector<2x16x32xf32> to vector<2x16x32xbf16>
    "tpu.trace_start"() <{level = 10 : i32, message = "gqd,gkd->gqk"}> : () -> ()
    %cst_7 = arith.constant dense<0.000000e+00> : vector<2x32x16xf32>
    %18 = tpu.matmul %16, %17, %cst_7 {dimension_numbers = #tpu.dot_dimension_numbers<[2], [2], [1], [1], [0, 0, 0, 1, 1, 1], [0], [0]>} : vector<2x32x32xbf16>, vector<2x16x32xbf16>, vector<2x32x16xf32> -> vector<2x32x16xf32>
    "tpu.trace_stop"() : () -> ()
    %cst_8 = arith.constant 0.176776692 : f32
    %19 = vector.broadcast %cst_8 : f32 to vector<2x32x16xf32>
    %20 = arith.mulf %18, %19 : vector<2x32x16xf32>
    %21 = tpu.iota {dimensions = array<i32: 0>} : vector<32x16xi32>
    %c16_i32 = arith.constant 16 : i32
    %c0_i32 = arith.constant 0 : i32
    %22 = arith.cmpi eq, %c16_i32, %c0_i32 : i32
    %c1_i32 = arith.constant 1 : i32
    %23 = arith.select %22, %c1_i32, %c16_i32 : i32
    %24 = vector.broadcast %23 : i32 to vector<32x16xi32>
    %25 = arith.remsi %21, %24 : vector<32x16xi32>
    %c0_i32_9 = arith.constant 0 : i32
    %26 = vector.broadcast %c0_i32_9 : i32 to vector<32x16xi32>
    %27 = arith.cmpi ne, %25, %26 : vector<32x16xi32>
    %c0_i32_10 = arith.constant 0 : i32
    %28 = vector.broadcast %c0_i32_10 : i32 to vector<32x16xi32>
    %29 = arith.cmpi slt, %25, %28 : vector<32x16xi32>
    %c0_i32_11 = arith.constant 0 : i32
    %30 = arith.cmpi slt, %23, %c0_i32_11 : i32
    %31 = vector.broadcast %30 : i1 to vector<32x16xi1>
    %32 = vector.broadcast %31 : vector<32x16xi1> to vector<32x16xi1>
    %33 = arith.xori %29, %32 : vector<32x16xi1>
    %34 = arith.andi %33, %27 : vector<32x16xi1>
    %35 = vector.broadcast %23 : i32 to vector<32x16xi32>
    %36 = arith.addi %25, %35 : vector<32x16xi32>
    %37 = arith.select %34, %36, %25 : vector<32x16xi1>, vector<32x16xi32>
    %38 = tpu.iota {dimensions = array<i32: 1>} : vector<32x16xi32>
    %39 = arith.cmpi sge, %37, %38 : vector<32x16xi32>
    %cst_12 = arith.constant 0.000000e+00 : f32
    %cst_13 = arith.constant -1.000000e+30 : f32
    %40 = vector.broadcast %cst_12 : f32 to vector<32x16xf32>
    %41 = vector.broadcast %cst_13 : f32 to vector<32x16xf32>
    %42 = arith.select %39, %40, %41 : vector<32x16xi1>, vector<32x16xf32>
    %43 = vector.shape_cast %42 : vector<32x16xf32> to vector<1x32x16xf32>
    %44 = vector.broadcast %43 : vector<1x32x16xf32> to vector<2x32x16xf32>
    %45 = arith.addf %20, %44 : vector<2x32x16xf32>
    %cst_14 = arith.constant dense<0xFF800000> : vector<2x32xf32>
    %46 = vector.multi_reduction <maximumf>, %45, %cst_14 [2] : vector<2x32x16xf32> to vector<2x32xf32>
    %47 = vector.shape_cast %46 : vector<2x32xf32> to vector<2x32x1xf32>
    %48 = vector.broadcast %47 : vector<2x32x1xf32> to vector<2x32x16xf32>
    %49 = arith.subf %45, %48 : vector<2x32x16xf32>
    %50 = math.exp %49 : vector<2x32x16xf32>
    %cst_15 = arith.constant dense<0.000000e+00> : vector<2x32xf32>
    %51 = vector.multi_reduction <add>, %50, %cst_15 [2] : vector<2x32x16xf32> to vector<2x32xf32>
    %52 = vector.shape_cast %51 : vector<2x32xf32> to vector<2x32x1xf32>
    %53 = tpu.reciprocal %52 {approx = true} : vector<2x32x1xf32> -> vector<2x32x1xf32>
    %54 = vector.broadcast %53 : vector<2x32x1xf32> to vector<2x32x16xf32>
    %55 = arith.mulf %50, %54 : vector<2x32x16xf32>
    %56 = arith.truncf %55 : vector<2x32x16xf32> to vector<2x32x16xbf16>
    %57 = arith.truncf %14 : vector<2x16x32xf32> to vector<2x16x32xbf16>
    "tpu.trace_start"() <{level = 10 : i32, message = "gqk,gkd->gqd"}> : () -> ()
    %cst_16 = arith.constant dense<0.000000e+00> : vector<2x32x32xf32>
    %58 = tpu.matmul %56, %57, %cst_16 {dimension_numbers = #tpu.dot_dimension_numbers<[2], [1], [1], [2], [0, 0, 0, 1, 1, 2], [0], [0]>} : vector<2x32x16xbf16>, vector<2x16x32xbf16>, vector<2x32x32xf32> -> vector<2x32x32xf32>
    "tpu.trace_stop"() : () -> ()
    %59 = vector.shape_cast %58 : vector<2x32x32xf32> to vector<4x16x32xf32>
    %60 = tpu.transpose %59, [1, 0, 2] : vector<4x16x32xf32> -> vector<16x4x32xf32>
    %61 = vector.shape_cast %60 : vector<16x4x32xf32> to vector<16x128xf32>
    %62 = arith.truncf %61 : vector<16x128xf32> to vector<16x128xbf16>
    %c0_17 = arith.constant 0 : index
    %c0_18 = arith.constant 0 : index
    %63 = vector.load %arg4[%c0_17, %c0_18] : memref<128x128xbf16, #tpu.memory_space<vmem>>, vector<128x128xbf16>
    %cst_19 = arith.constant dense<0.000000e+00> : vector<16x128xf32>
    %64 = tpu.matmul %62, %63, %cst_19 {dimension_numbers = #tpu.dot_dimension_numbers<[1], [0], [0], [1], [0, 0, 1, 1], [], []>} : vector<16x128xbf16>, vector<128x128xbf16>, vector<16x128xf32> -> vector<16x128xf32>
    %c0_20 = arith.constant 0 : index
    %c0_21 = arith.constant 0 : index
    %65 = vector.load %arg5[%c0_20, %c0_21] : memref<16x128xf32, #tpu.memory_space<vmem>>, vector<16x128xf32>
    tpu.vector_store %arg5[%c0_20, %c0_21], %64 {strides = array<i32>} : memref<16x128xf32, #tpu.memory_space<vmem>>, vector<16x128xf32>,
    return
  }
}

</mosaic_0001>

<llo_original>
// kernel: tile.34
$region0: #{tile.34}
  %s0 = inlined_call_operand.vmem [shape: f32[16,4,32], index: 0, kind: input, shape index: {}]
  %s1 = inlined_call_operand.vmem [shape: f32[16,128], index: 1, kind: output, shape index: {}]
  $region1: #{tile.34} parent=0
    #allocation0 [shape = 'u8[65536]{0}', space=vmem, size = 0x10000, scoped, tag = 'scoped mem for input reshape']
    %s3 = sshllo.u32 0, 4
    %s4 = smul.addr 4, 15
    %s5 = scalar_lea.vmem %s0, %s4
    %v6 = vld [vmem:[%s5] sm:%s3]
    %s7 = scalar_lea.vmem [#allocation0], 120
    %8 = vst [vmem:[%s7] sm:%s3] %v6
    %s9 = smul.addr 4, 14
    %s10 = scalar_lea.vmem %s0, %s9
    %v11 = vld [vmem:[%s10] sm:%s3]
    %s12 = scalar_lea.vmem [#allocation0], 112
    %13 = vst [vmem:[%s12] sm:%s3] %v11
    %s14 = smul.addr 4, 13
    %s15 = scalar_lea.vmem %s0, %s14
    %v16 = vld [vmem:[%s15] sm:%s3]
    %s17 = scalar_lea.vmem [#allocation0], 104
    %18 = vst [vmem:[%s17] sm:%s3] %v16
    %s19 = smul.addr 4, 12
    %s20 = scalar_lea.vmem %s0, %s19
    %v21 = vld [vmem:[%s20] sm:%s3]
    %s22 = scalar_lea.vmem [#allocation0], 96
    %23 = vst [vmem:[%s22] sm:%s3] %v21
    %s24 = smul.addr 4, 11
    %s25 = scalar_lea.vmem %s0, %s24
    %v26 = vld [vmem:[%s25] sm:%s3]
    %s27 = scalar_lea.vmem [#allocation0], 88
    %28 = vst [vmem:[%s27] sm:%s3] %v26
    %s29 = smul.addr 4, 10
    %s30 = scalar_lea.vmem %s0, %s29
    %v31 = vld [vmem:[%s30] sm:%s3]
    %s32 = scalar_lea.vmem [#allocation0], 80
    %33 = vst [vmem:[%s32] sm:%s3] %v31
    %s34 = smul.addr 4, 9
    %s35 = scalar_lea.vmem %s0, %s34
    %v36 = vld [vmem:[%s35] sm:%s3]
    %s37 = scalar_lea.vmem [#allocation0], 72
    %38 = vst [vmem:[%s37] sm:%s3] %v36
    %s39 = smul.addr 4, 8
    %s40 = scalar_lea.vmem %s0, %s39
    %v41 = vld [vmem:[%s40] sm:%s3]
    %s42 = scalar_lea.vmem [#allocation0], 64
    %43 = vst [vmem:[%s42] sm:%s3] %v41
    %s44 = smul.addr 4, 7
    %s45 = scalar_lea.vmem %s0, %s44
    %v46 = vld [vmem:[%s45] sm:%s3]
    %s47 = scalar_lea.vmem [#allocation0], 56
    %48 = vst [vmem:[%s47] sm:%s3] %v46
    %s49 = smul.addr 4, 6
    %s50 = scalar_lea.vmem %s0, %s49
    %v51 = vld [vmem:[%s50] sm:%s3]
    %s52 = scalar_lea.vmem [#allocation0], 48
    %53 = vst [vmem:[%s52] sm:%s3] %v51
    %s54 = smul.addr 4, 5
    %s55 = scalar_lea.vmem %s0, %s54
    %v56 = vld [vmem:[%s55] sm:%s3]
    %s57 = scalar_lea.vmem [#allocation0], 40
    %58 = vst [vmem:[%s57] sm:%s3] %v56
    %s59 = smul.addr 4, 4
    %s60 = scalar_lea.vmem %s0, %s59
    %v61 = vld [vmem:[%s60] sm:%s3]
    %s62 = scalar_lea.vmem [#allocation0], 32
    %63 = vst [vmem:[%s62] sm:%s3] %v61
    %s64 = smul.addr 4, 3
    %s65 = scalar_lea.vmem %s0, %s64
    %v66 = vld [vmem:[%s65] sm:%s3]
    %s67 = scalar_lea.vmem [#allocation0], 24
    %68 = vst [vmem:[%s67] sm:%s3] %v66
    %s69 = smul.addr 4, 2
    %s70 = scalar_lea.vmem %s0, %s69
    %v71 = vld [vmem:[%s70] sm:%s3]
    %s72 = scalar_lea.vmem [#allocation0], 16
    %73 = vst [vmem:[%s72] sm:%s3] %v71
    %s74 = scalar_lea.vmem %s0, 4
    %v75 = vld [vmem:[%s74] sm:%s3]
    %s76 = scalar_lea.vmem [#allocation0], 8
    %77 = vst [vmem:[%s76] sm:%s3] %v75
    %v78 = vld [vmem:[%s0] sm:%s3]
    %79 = vst [vmem:[#allocation0] sm:%s3] %v78
    %v80 = vld [vmem:[#allocation0] ss:$8 sm:$0xf]
    %v81 = vld [vmem:[#allocation0] ss:$8 sm:$0xf0]
    %vm82 = vcmask 1047556
    %v83 = vsel %vm82, %v81, %v80
    %vm84 = vcmask 261120
    %85 = vst.msk [vmem:[%s1] sm:$0xff] %vm84, %v83
    %s86 = scalar_lea.vmem [#allocation0], 64
    %v87 = vld [vmem:[%s86] ss:$8 sm:$0xf]
    %s88 = scalar_lea.vmem [#allocation0], 64
    %v89 = vld [vmem:[%s88] ss:$8 sm:$0xf0]
    %vm90 = vcmask 1047556
    %v91 = vsel %vm90, %v89, %v87
    %vm92 = vcmask 261120
    %s93 = scalar_lea.vmem %s1, 8
    %94 = vst.msk [vmem:[%s93] sm:$0xff] %vm92, %v91
    %s95 = scalar_lea.vmem [#allocation0], 3
    %v96 = vld [vmem:[%s95] ss:$8 sm:$0xf]
    %s97 = scalar_lea.vmem [#allocation0], 3
    %v98 = vld [vmem:[%s97] ss:$8 sm:$0xf0]
    %vm99 = vcmask 1047556
    %v100 = vsel %vm99, %v98, %v96
    %101 = vrot.lane.b32.xlu0 %v100, 96
    %v102 = vpop.permute.xlu0 %101
    %vm103 = vcmask 1048320
    %104 = vst.msk [vmem:[%s1] sm:$0xff] %vm103, %v102
    %s105 = scalar_lea.vmem [#allocation0], 67
    %v106 = vld [vmem:[%s105] ss:$8 sm:$0xf]
    %s107 = scalar_lea.vmem [#allocation0], 67
    %v108 = vld [vmem:[%s107] ss:$8 sm:$0xf0]
    %vm109 = vcmask 1047556
    %v110 = vsel %vm109, %v108, %v106
    %111 = vrot.lane.b32.xlu0 %v110, 96
    %v112 = vpop.permute.xlu0 %111
    %vm113 = vcmask 1048320
    %s114 = scalar_lea.vmem %s1, 8
    %115 = vst.msk [vmem:[%s114] sm:$0xff] %vm113, %v112
    %s116 = scalar_lea.vmem [#allocation0], 2
    %v117 = vld [vmem:[%s116] ss:$8 sm:$0xf]
    %s118 = scalar_lea.vmem [#allocation0], 2
    %v119 = vld [vmem:[%s118] ss:$8 sm:$0xf0]
    %vm120 = vcmask 1047556
    %v121 = vsel %vm120, %v119, %v117
    %122 = vrot.lane.b32.xlu0 %v121, 64
    %v123 = vpop.permute.xlu0 %122
    %vm124 = vcmask 785920
    %125 = vst.msk [vmem:[%s1] sm:$0xff] %vm124, %v123
    %s126 = scalar_lea.vmem [#allocation0], 66
    %v127 = vld [vmem:[%s126] ss:$8 sm:$0xf]
    %s128 = scalar_lea.vmem [#allocation0], 66
    %v129 = vld [vmem:[%s128] ss:$8 sm:$0xf0]
    %vm130 = vcmask 1047556
    %v131 = vsel %vm130, %v129, %v127
    %132 = vrot.lane.b32.xlu0 %v131, 64
    %v133 = vpop.permute.xlu0 %132
    %vm134 = vcmask 785920
    %s135 = scalar_lea.vmem %s1, 8
    %136 = vst.msk [vmem:[%s135] sm:$0xff] %vm134, %v133
    %s137 = scalar_lea.vmem [#allocation0], 1
    %v138 = vld [vmem:[%s137] ss:$8 sm:$0xf]
    %s139 = scalar_lea.vmem [#allocation0], 1
    %v140 = vld [vmem:[%s139] ss:$8 sm:$0xf0]
    %vm141 = vcmask 1047556
    %v142 = vsel %vm141, %v140, %v138
    %143 = vrot.lane.b32.xlu0 %v142, 32
    %v144 = vpop.permute.xlu0 %143
    %vm145 = vcmask 523520
    %146 = vst.msk [vmem:[%s1] sm:$0xff] %vm145, %v144
    %s147 = scalar_lea.vmem [#allocation0], 65
    %v148 = vld [vmem:[%s147] ss:$8 sm:$0xf]
    %s149 = scalar_lea.vmem [#allocation0], 65
    %v150 = vld [vmem:[%s149] ss:$8 sm:$0xf0]
    %vm151 = vcmask 1047556
    %v152 = vsel %vm151, %v150, %v148
    %153 = vrot.lane.b32.xlu0 %v152, 32
    %v154 = vpop.permute.xlu0 %153
    %vm155 = vcmask 523520
    %s156 = scalar_lea.vmem %s1, 8
    %157 = vst.msk [vmem:[%s156] sm:$0xff] %vm155, %v154

// kernel: tile.39
$region0: #{tile.39}
  %s0 = inlined_call_operand.vmem [shape: f32[16,2,32], index: 0, kind: input, shape index: {}]
  %s1 = inlined_call_operand.vmem [shape: f32[16,64], index: 1, kind: output, shape index: {}]
  $region1: #{tile.39} parent=0
    #allocation0 [shape = 'u8[65536]{0}', space=vmem, size = 0x10000, scoped, tag = 'scoped mem for input reshape']
    %s3 = sshllo.u32 0, 2
    %s4 = smul.addr 2, 15
    %s5 = scalar_lea.vmem %s0, %s4
    %v6 = vld [vmem:[%s5] sm:%s3]
    %s7 = scalar_lea.vmem [#allocation0], 120
    %8 = vst [vmem:[%s7] sm:%s3] %v6
    %s9 = smul.addr 2, 14
    %s10 = scalar_lea.vmem %s0, %s9
    %v11 = vld [vmem:[%s10] sm:%s3]
    %s12 = scalar_lea.vmem [#allocation0], 112
    %13 = vst [vmem:[%s12] sm:%s3] %v11
    %s14 = smul.addr 2, 13
    %s15 = scalar_lea.vmem %s0, %s14
    %v16 = vld [vmem:[%s15] sm:%s3]
    %s17 = scalar_lea.vmem [#allocation0], 104
    %18 = vst [vmem:[%s17] sm:%s3] %v16
    %s19 = smul.addr 2, 12
    %s20 = scalar_lea.vmem %s0, %s19
    %v21 = vld [vmem:[%s20] sm:%s3]
    %s22 = scalar_lea.vmem [#allocation0], 96
    %23 = vst [vmem:[%s22] sm:%s3] %v21
    %s24 = smul.addr 2, 11
    %s25 = scalar_lea.vmem %s0, %s24
    %v26 = vld [vmem:[%s25] sm:%s3]
    %s27 = scalar_lea.vmem [#allocation0], 88
    %28 = vst [vmem:[%s27] sm:%s3] %v26
    %s29 = smul.addr 2, 10
    %s30 = scalar_lea.vmem %s0, %s29
    %v31 = vld [vmem:[%s30] sm:%s3]
    %s32 = scalar_lea.vmem [#allocation0], 80
    %33 = vst [vmem:[%s32] sm:%s3] %v31
    %s34 = smul.addr 2, 9
    %s35 = scalar_lea.vmem %s0, %s34
    %v36 = vld [vmem:[%s35] sm:%s3]
    %s37 = scalar_lea.vmem [#allocation0], 72
    %38 = vst [vmem:[%s37] sm:%s3] %v36
    %s39 = smul.addr 2, 8
    %s40 = scalar_lea.vmem %s0, %s39
    %v41 = vld [vmem:[%s40] sm:%s3]
    %s42 = scalar_lea.vmem [#allocation0], 64
    %43 = vst [vmem:[%s42] sm:%s3] %v41
    %s44 = smul.addr 2, 7
    %s45 = scalar_lea.vmem %s0, %s44
    %v46 = vld [vmem:[%s45] sm:%s3]
    %s47 = scalar_lea.vmem [#allocation0], 56
    %48 = vst [vmem:[%s47] sm:%s3] %v46
    %s49 = smul.addr 2, 6
    %s50 = scalar_lea.vmem %s0, %s49
    %v51 = vld [vmem:[%s50] sm:%s3]
    %s52 = scalar_lea.vmem [#allocation0], 48
    %53 = vst [vmem:[%s52] sm:%s3] %v51
    %s54 = smul.addr 2, 5
    %s55 = scalar_lea.vmem %s0, %s54
    %v56 = vld [vmem:[%s55] sm:%s3]
    %s57 = scalar_lea.vmem [#allocation0], 40
    %58 = vst [vmem:[%s57] sm:%s3] %v56
    %s59 = smul.addr 2, 4
    %s60 = scalar_lea.vmem %s0, %s59
    %v61 = vld [vmem:[%s60] sm:%s3]
    %s62 = scalar_lea.vmem [#allocation0], 32
    %63 = vst [vmem:[%s62] sm:%s3] %v61
    %s64 = smul.addr 2, 3
    %s65 = scalar_lea.vmem %s0, %s64
    %v66 = vld [vmem:[%s65] sm:%s3]
    %s67 = scalar_lea.vmem [#allocation0], 24
    %68 = vst [vmem:[%s67] sm:%s3] %v66
    %s69 = smul.addr 2, 2
    %s70 = scalar_lea.vmem %s0, %s69
    %v71 = vld [vmem:[%s70] sm:%s3]
    %s72 = scalar_lea.vmem [#allocation0], 16
    %73 = vst [vmem:[%s72] sm:%s3] %v71
    %s74 = scalar_lea.vmem %s0, 2
    %v75 = vld [vmem:[%s74] sm:%s3]
    %s76 = scalar_lea.vmem [#allocation0], 8
    %77 = vst [vmem:[%s76] sm:%s3] %v75
    %v78 = vld [vmem:[%s0] sm:%s3]
    %79 = vst [vmem:[#allocation0] sm:%s3] %v78
    %v80 = vld [vmem:[#allocation0] ss:$8 sm:$0xf]
    %v81 = vld [vmem:[#allocation0] ss:$8 sm:$0xf0]
    %vm82 = vcmask 1047556
    %v83 = vsel %vm82, %v81, %v80
    %vm84 = vcmask 261120
    %85 = vst.msk [vmem:[%s1] sm:$0xff] %vm84, %v83
    %s86 = scalar_lea.vmem [#allocation0], 64
    %v87 = vld [vmem:[%s86] ss:$8 sm:$0xf]
    %s88 = scalar_lea.vmem [#allocation0], 64
    %v89 = vld [vmem:[%s88] ss:$8 sm:$0xf0]
    %vm90 = vcmask 1047556
    %v91 = vsel %vm90, %v89, %v87
    %vm92 = vcmask 261120
    %s93 = scalar_lea.vmem %s1, 8
    %94 = vst.msk [vmem:[%s93] sm:$0xff] %vm92, %v91
    %s95 = scalar_lea.vmem [#allocation0], 1
    %v96 = vld [vmem:[%s95] ss:$8 sm:$0xf]
    %s97 = scalar_lea.vmem [#allocation0], 1
    %v98 = vld [vmem:[%s97] ss:$8 sm:$0xf0]
    %vm99 = vcmask 1047556
    %v100 = vsel %vm99, %v98, %v96
    %101 = vrot.lane.b32.xlu0 %v100, 32
    %v102 = vpop.permute.xlu0 %101
    %vm103 = vcmask 523520
    %104 = vst.msk [vmem:[%s1] sm:$0xff] %vm103, %v102
    %s105 = scalar_lea.vmem [#allocation0], 65
    %v106 = vld [vmem:[%s105] ss:$8 sm:$0xf]
    %s107 = scalar_lea.vmem [#allocation0], 65
    %v108 = vld [vmem:[%s107] ss:$8 sm:$0xf0]
    %vm109 = vcmask 1047556
    %v110 = vsel %vm109, %v108, %v106
    %111 = vrot.lane.b32.xlu0 %v110, 32
    %v112 = vpop.permute.xlu0 %111
    %vm113 = vcmask 523520
    %s114 = scalar_lea.vmem %s1, 8
    %115 = vst.msk [vmem:[%s114] sm:$0xff] %vm113, %v112

// kernel: llama_attention.1
$region0: #{llama_attention.1}
  #allocation0 [shape = 'u32[]', space=smem, size = 0x4, offset = 0x4, fixed_abs, tag = 'smem constant byte address 0x4 - core index']
  #allocation1 [shape = 'u32[144,128]{1,0:T(1,128)}', space=vmem, size = 0x12000, scoped, tag = 'internal scratch']
  %s0 = inlined_call_operand.vmem [shape: bf16[16,128], index: 0, kind: input, shape index: {}]
  %s1 = inlined_call_operand.vmem [shape: f32[16,256], index: 1, kind: input, shape index: {}]
  %s2 = inlined_call_operand.vmem [shape: f32[16,256], index: 2, kind: input, shape index: {}]
  %s3 = inlined_call_operand.vmem [shape: bf16[128,512], index: 3, kind: input, shape index: {}]
  %s4 = inlined_call_operand.vmem [shape: bf16[128,128], index: 4, kind: input, shape index: {}]
  %s5 = inlined_call_operand.hbm [shape: f32[16,128], index: 5, kind: output, shape index: {}]
  %s6 = sld [smem:[#allocation0]]
  $region30: #{llama_attention.1} parent=0
    _
  %s8 = ssub.s32 1, %s6
  %s9 = scalar_select 0, %s8, %s6
  $region1: #{llama_attention.1} parent=0
    #allocation2 [shape = 'u8[8192]{0}', space=vmem, size = 0x2000, scoped, tag = 'output window, operand 0, single buffered']
    #allocation3 [shape = 's32[1]{0}', space=sflag, size = 0x4, scoped, tag = 'scoped memory for llama_attention.1']
    %10 = vsyncpa [#allocation3], 0
    // Predicated region
    $region2: #{llama_attention.1} parent=1 // pred_check
      _
    $region3: #{llama_attention.1} parent=1 // pred_check_branch
      %12 = sbr.rel (0) target = $region5
    $region4: #{llama_attention.1} parent=1 // pred_region
      _
    $region5: #{llama_attention.1} parent=1 // pred_fallthru
      _
    // Predicated region
    $region6: #{llama_attention.1} parent=1 // pred_check
      _
    $region7: #{llama_attention.1} parent=1 // pred_check_branch
      %14 = sbr.rel (0) target = $region9
    $region8: #{llama_attention.1} parent=1 // pred_region
      _
    $region9: #{llama_attention.1} parent=1 // pred_fallthru
      _
    // Predicated region
    $region10: #{llama_attention.1} parent=1 // pred_check
      _
    $region11: #{llama_attention.1} parent=1 // pred_check_branch
      %16 = sbr.rel (0) target = $region13
    $region12: #{llama_attention.1} parent=1 // pred_region
      _
    $region13: #{llama_attention.1} parent=1 // pred_fallthru
      _
    // Predicated region
    $region14: #{llama_attention.1} parent=1 // pred_check
      _
    $region15: #{llama_attention.1} parent=1 // pred_check_branch
      %18 = sbr.rel (0) target = $region17
    $region16: #{llama_attention.1} parent=1 // pred_region
      _
    $region17: #{llama_attention.1} parent=1 // pred_fallthru
      _
    // Predicated region
    $region18: #{llama_attention.1} parent=1 // pred_check
      _
    $region19: #{llama_attention.1} parent=1 // pred_check_branch
      %20 = sbr.rel (0) target = $region21
    $region20: #{llama_attention.1} parent=1 // pred_region
      _
    $region21: #{llama_attention.1} parent=1 // pred_fallthru
      _
    %v22 = vld [vmem:[%s0] sm:$0xf]
    %v23 = vld [vmem:[%s0 + $0x4] sm:$0xf]
    %v24 = vld [vmem:[%s3] sm:$0xff]
    %v25 = vld [vmem:[%s3 + $0x8] sm:$0xff]
    %v26 = vld [vmem:[%s3 + $0x10] sm:$0xff]
    %v27 = vld [vmem:[%s3 + $0x18] sm:$0xff]
    %v28 = vld [vmem:[%s3 + $0x20] sm:$0xff]
    %v29 = vld [vmem:[%s3 + $0x28] sm:$0xff]
    %v30 = vld [vmem:[%s3 + $0x30] sm:$0xff]
    %v31 = vld [vmem:[%s3 + $0x38] sm:$0xff]
    %v32 = vld [vmem:[%s3 + $0x40] sm:$0xff]
    %v33 = vld [vmem:[%s3 + $0x48] sm:$0xff]
    %v34 = vld [vmem:[%s3 + $0x50] sm:$0xff]
    %v35 = vld [vmem:[%s3 + $0x58] sm:$0xff]
    %v36 = vld [vmem:[%s3 + $0x60] sm:$0xff]
    %v37 = vld [vmem:[%s3 + $0x68] sm:$0xff]
    %v38 = vld [vmem:[%s3 + $0x70] sm:$0xff]
    %v39 = vld [vmem:[%s3 + $0x78] sm:$0xff]
    %v40 = vld [vmem:[%s3 + $0x80] sm:$0xff]
    %v41 = vld [vmem:[%s3 + $0x88] sm:$0xff]
    %v42 = vld [vmem:[%s3 + $0x90] sm:$0xff]
    %v43 = vld [vmem:[%s3 + $0x98] sm:$0xff]
    %v44 = vld [vmem:[%s3 + $0xa0] sm:$0xff]
    %v45 = vld [vmem:[%s3 + $0xa8] sm:$0xff]
    %v46 = vld [vmem:[%s3 + $0xb0] sm:$0xff]
    %v47 = vld [vmem:[%s3 + $0xb8] sm:$0xff]
    %v48 = vld [vmem:[%s3 + $0xc0] sm:$0xff]
    %v49 = vld [vmem:[%s3 + $0xc8] sm:$0xff]
    %v50 = vld [vmem:[%s3 + $0xd0] sm:$0xff]
    %v51 = vld [vmem:[%s3 + $0xd8] sm:$0xff]
    %v52 = vld [vmem:[%s3 + $0xe0] sm:$0xff]
    %v53 = vld [vmem:[%s3 + $0xe8] sm:$0xff]
    %v54 = vld [vmem:[%s3 + $0xf0] sm:$0xff]
    %v55 = vld [vmem:[%s3 + $0xf8] sm:$0xff]
    %v58 = vunpack.c.l.b16 %v22
    %v59 = vunpack.c.l.b16 %v23
    %v60 = vpack.c.b16 %v59, %v58
    %v94 = vunpack.c.l.b16 %v24
    %v95 = vunpack.c.h.b16 %v24
    %v96 = vunpack.c.l.b16 %v25
    %v97 = vunpack.c.h.b16 %v25
    %v98 = vunpack.c.l.b16 %v26
    %v99 = vunpack.c.h.b16 %v26
    %v100 = vunpack.c.l.b16 %v27
    %v101 = vunpack.c.h.b16 %v27
    %v102 = vunpack.c.l.b16 %v28
    %v103 = vunpack.c.h.b16 %v28
    %v104 = vunpack.c.l.b16 %v29
    %v105 = vunpack.c.h.b16 %v29
    %v106 = vunpack.c.l.b16 %v30
    %v107 = vunpack.c.h.b16 %v30
    %v108 = vunpack.c.l.b16 %v31
    %v109 = vunpack.c.h.b16 %v31
    %v110 = vunpack.c.l.b16 %v32
    %v111 = vunpack.c.h.b16 %v32
    %v112 = vunpack.c.l.b16 %v33
    %v113 = vunpack.c.h.b16 %v33
    %v114 = vunpack.c.l.b16 %v34
    %v115 = vunpack.c.h.b16 %v34
    %v116 = vunpack.c.l.b16 %v35
    %v117 = vunpack.c.h.b16 %v35
    %v118 = vunpack.c.l.b16 %v36
    %v119 = vunpack.c.h.b16 %v36
    %v120 = vunpack.c.l.b16 %v37
    %v121 = vunpack.c.h.b16 %v37
    %v122 = vunpack.c.l.b16 %v38
    %v123 = vunpack.c.h.b16 %v38
    %v124 = vunpack.c.l.b16 %v39
    %v125 = vunpack.c.h.b16 %v39
    %v126 = vunpack.c.l.b16 %v40
    %v127 = vunpack.c.h.b16 %v40
    %v128 = vunpack.c.l.b16 %v41
    %v129 = vunpack.c.h.b16 %v41
    %v130 = vunpack.c.l.b16 %v42
    %v131 = vunpack.c.h.b16 %v42
    %v132 = vunpack.c.l.b16 %v43
    %v133 = vunpack.c.h.b16 %v43
    %v134 = vunpack.c.l.b16 %v44
    %v135 = vunpack.c.h.b16 %v44
    %v136 = vunpack.c.l.b16 %v45
    %v137 = vunpack.c.h.b16 %v45
    %v138 = vunpack.c.l.b16 %v46
    %v139 = vunpack.c.h.b16 %v46
    %v140 = vunpack.c.l.b16 %v47
    %v141 = vunpack.c.h.b16 %v47
    %v142 = vunpack.c.l.b16 %v48
    %v143 = vunpack.c.h.b16 %v48
    %v144 = vunpack.c.l.b16 %v49
    %v145 = vunpack.c.h.b16 %v49
    %v146 = vunpack.c.l.b16 %v50
    %v147 = vunpack.c.h.b16 %v50
    %v148 = vunpack.c.l.b16 %v51
    %v149 = vunpack.c.h.b16 %v51
    %v150 = vunpack.c.l.b16 %v52
    %v151 = vunpack.c.h.b16 %v52
    %v152 = vunpack.c.l.b16 %v53
    %v153 = vunpack.c.h.b16 %v53
    %v154 = vunpack.c.l.b16 %v54
    %v155 = vunpack.c.h.b16 %v54
    %v156 = vunpack.c.l.b16 %v55
    %v157 = vunpack.c.h.b16 %v55
    %v158 = vpack.c.b16 %v98, %v94
    %v159 = vpack.c.b16 %v99, %v95
    %v160 = vpack.c.b16 %v100, %v96
    %v161 = vpack.c.b16 %v101, %v97
    %v162 = vpack.c.b16 %v106, %v102
    %v163 = vpack.c.b16 %v107, %v103
    %v164 = vpack.c.b16 %v108, %v104
    %v165 = vpack.c.b16 %v109, %v105
    %v166 = vpack.c.b16 %v114, %v110
    %v167 = vpack.c.b16 %v115, %v111
    %v168 = vpack.c.b16 %v116, %v112
    %v169 = vpack.c.b16 %v117, %v113
    %v170 = vpack.c.b16 %v122, %v118
    %v171 = vpack.c.b16 %v123, %v119
    %v172 = vpack.c.b16 %v124, %v120
    %v173 = vpack.c.b16 %v125, %v121
    %v174 = vpack.c.b16 %v130, %v126
    %v175 = vpack.c.b16 %v131, %v127
    %v176 = vpack.c.b16 %v132, %v128
    %v177 = vpack.c.b16 %v133, %v129
    %v178 = vpack.c.b16 %v138, %v134
    %v179 = vpack.c.b16 %v139, %v135
    %v180 = vpack.c.b16 %v140, %v136
    %v181 = vpack.c.b16 %v141, %v137
    %v182 = vpack.c.b16 %v146, %v142
    %v183 = vpack.c.b16 %v147, %v143
    %v184 = vpack.c.b16 %v148, %v144
    %v185 = vpack.c.b16 %v149, %v145
    %v186 = vpack.c.b16 %v154, %v150
    %v187 = vpack.c.b16 %v155, %v151
    %v188 = vpack.c.b16 %v156, %v152
    %v189 = vpack.c.b16 %v157, %v153
    %222 = vmatprep.subr.bf16.mxu0 %v159
    %223 = vmatpush1.bf16.msra.mxu0 %v158
    %224 = vmatprep.subr.bf16.mxu0 %v163
    %225 = vmatpush1.bf16.msra.mxu0 %v162
    %226 = vmatprep.subr.bf16.mxu0 %v167
    %227 = vmatpush1.bf16.msra.mxu0 %v166
    %228 = vmatprep.subr.bf16.mxu0 %v171
    %229 = vmatpush1.bf16.msra.mxu0 %v170
    %230 = vmatprep.subr.bf16.mxu0 %v175
    %231 = vmatpush1.bf16.msra.mxu0 %v174
    %232 = vmatprep.subr.bf16.mxu0 %v179
    %233 = vmatpush1.bf16.msra.mxu0 %v178
    %234 = vmatprep.subr.bf16.mxu0 %v183
    %235 = vmatpush1.bf16.msra.mxu0 %v182
    %236 = vmatprep.subr.bf16.mxu0 %v187
    %237 = vmatpush1.bf16.msra.mxu0 %v186
    %238 = vmatprep.subr.bf16.mxu0 0
    %239 = vmatpush1.bf16.msra.mxu0 0
    %240 = vmatprep.subr.bf16.mxu0 0
    %241 = vmatpush1.bf16.msra.mxu0 0
    %242 = vmatprep.subr.bf16.mxu0 0
    %243 = vmatpush1.bf16.msra.mxu0 0
    %244 = vmatprep.subr.bf16.mxu0 0
    %245 = vmatpush1.bf16.msra.mxu0 0
    %246 = vmatprep.subr.bf16.mxu0 0
    %247 = vmatpush1.bf16.msra.mxu0 0
    %248 = vmatprep.subr.bf16.mxu0 0
    %249 = vmatpush1.bf16.msra.mxu0 0
    %250 = vmatprep.subr.bf16.mxu0 0
    %251 = vmatpush1.bf16.msra.mxu0 0
    %252 = vmatprep.subr.bf16.mxu0 0
    %253 = vmatpush1.bf16.msra.mxu0 0
    %254 = vmatprep.mubr.bf16.mxu0 0
    %255 = vmatmul.mubr.bf16.gmra.mrb[0].mxu0 %v60
    %v256 = vpop.f32.mrb[0].mxu0
    %v257 = vadd.f32 0.0, %v256
    %v258 = vpop.f32.mrb[0].mxu0
    %v259 = vadd.f32 0.0, %v258
    %v260 = vpop.f32.mrb[0].mxu0
    %v261 = vadd.f32 0.0, %v260
    %v262 = vpop.f32.mrb[0].mxu0
    %v263 = vadd.f32 0.0, %v262
    %264 = vdwg.mxu0
    %265 = vmatprep.subr.bf16.mxu0 %v161
    %266 = vmatpush1.bf16.msra.mxu0 %v160
    %267 = vmatprep.subr.bf16.mxu0 %v165
    %268 = vmatpush1.bf16.msra.mxu0 %v164
    %269 = vmatprep.subr.bf16.mxu0 %v169
    %270 = vmatpush1.bf16.msra.mxu0 %v168
    %271 = vmatprep.subr.bf16.mxu0 %v173
    %272 = vmatpush1.bf16.msra.mxu0 %v172
    %273 = vmatprep.subr.bf16.mxu0 %v177
    %274 = vmatpush1.bf16.msra.mxu0 %v176
    %275 = vmatprep.subr.bf16.mxu0 %v181
    %276 = vmatpush1.bf16.msra.mxu0 %v180
    %277 = vmatprep.subr.bf16.mxu0 %v185
    %278 = vmatpush1.bf16.msra.mxu0 %v184
    %279 = vmatprep.subr.bf16.mxu0 %v189
    %280 = vmatpush1.bf16.msra.mxu0 %v188
    %281 = vmatprep.subr.bf16.mxu0 0
    %282 = vmatpush1.bf16.msra.mxu0 0
    %283 = vmatprep.subr.bf16.mxu0 0
    %284 = vmatpush1.bf16.msra.mxu0 0
    %285 = vmatprep.subr.bf16.mxu0 0
    %286 = vmatpush1.bf16.msra.mxu0 0
    %287 = vmatprep.subr.bf16.mxu0 0
    %288 = vmatpush1.bf16.msra.mxu0 0
    %289 = vmatprep.subr.bf16.mxu0 0
    %290 = vmatpush1.bf16.msra.mxu0 0
    %291 = vmatprep.subr.bf16.mxu0 0
    %292 = vmatpush1.bf16.msra.mxu0 0
    %293 = vmatprep.subr.bf16.mxu0 0
    %294 = vmatpush1.bf16.msra.mxu0 0
    %295 = vmatprep.subr.bf16.mxu0 0
    %296 = vmatpush1.bf16.msra.mxu0 0
    %297 = vmatprep.mubr.bf16.mxu0 0
    %298 = vmatmul.mubr.bf16.gmra.mrb[0].mxu0 %v60
    %v299 = vpop.f32.mrb[0].mxu0
    %v300 = vadd.f32 0.0, %v299
    %v301 = vpop.f32.mrb[0].mxu0
    %v302 = vadd.f32 0.0, %v301
    %v303 = vpop.f32.mrb[0].mxu0
    %v304 = vadd.f32 0.0, %v303
    %v305 = vpop.f32.mrb[0].mxu0
    %v306 = vadd.f32 0.0, %v305
    %307 = vdwg.mxu0
    %v308 = vld [vmem:[%s1] sm:$0xff]
    %v309 = vld [vmem:[%s1 + $0x8] sm:$0xff]
    %v310 = vld [vmem:[%s1 + $0x10] sm:$0xff]
    %v311 = vld [vmem:[%s1 + $0x18] sm:$0xff]
    %v312 = vmul.f32 %v257, %v308
    %v313 = vmul.f32 %v259, %v309
    %v314 = vmul.f32 %v261, %v310
    %v315 = vmul.f32 %v263, %v311
    %v316 = vld [vmem:[%s2] sm:$0xff]
    %v317 = vld [vmem:[%s2 + $0x8] sm:$0xff]
    %v318 = vld [vmem:[%s2 + $0x10] sm:$0xff]
    %v319 = vld [vmem:[%s2 + $0x18] sm:$0xff]
    %v320 = vmul.f32 %v300, %v316
    %v321 = vmul.f32 %v302, %v317
    %v322 = vmul.f32 %v304, %v318
    %v323 = vmul.f32 %v306, %v319
    %v324 = vadd.f32 %v312, %v320
    %v325 = vadd.f32 %v313, %v321
    %v326 = vadd.f32 %v314, %v322
    %v327 = vadd.f32 %v315, %v323
    %330 = vrot.lane.b32.xlu0 %v324, 96
    %v331 = vpop.permute.xlu0 %330
    %332 = vrot.lane.b32.xlu0 %v326, 96
    %v333 = vpop.permute.xlu0 %332
    %336 = vrot.lane.b32.xlu0 %v324, 64
    %v337 = vpop.permute.xlu0 %336
    %338 = vrot.lane.b32.xlu0 %v326, 64
    %v339 = vpop.permute.xlu0 %338
    %342 = vrot.lane.b32.xlu0 %v324, 32
    %v343 = vpop.permute.xlu0 %342
    %344 = vrot.lane.b32.xlu0 %v326, 32
    %v345 = vpop.permute.xlu0 %344
    %350 = vrot.lane.b32.xlu0 %v325, 96
    %v351 = vpop.permute.xlu0 %350
    %352 = vrot.lane.b32.xlu0 %v327, 96
    %v353 = vpop.permute.xlu0 %352
    %356 = vrot.lane.b32.xlu0 %v325, 64
    %v357 = vpop.permute.xlu0 %356
    %358 = vrot.lane.b32.xlu0 %v327, 64
    %v359 = vpop.permute.xlu0 %358
    %362 = vrot.lane.b32.xlu0 %v325, 32
    %v363 = vpop.permute.xlu0 %362
    %364 = vrot.lane.b32.xlu0 %v327, 32
    %v365 = vpop.permute.xlu0 %364
    %v368 = vcombine.low %v324, %v337
    %v369 = vcombine.high %v324, %v337
    %v371 = vunpack.c.l.s4 1983009808
    %v372 = vunpack.c.0.s8 %v371
    %v373 = vlaneseq
    %v374 = vshrl.u32 %v373, 7
    %v375 = vsub.s32 %v372, %v374
    %v376 = vrot.slane %v368, %v375
    %v378 = vunpack.c.l.s4 1983009808
    %v379 = vunpack.c.0.s8 %v378
    %v380 = vlaneseq
    %v381 = vshrl.u32 %v380, 7
    %v382 = vsub.s32 %v379, %v381
    %v383 = vrot.slane %v369, %v382
    %v384 = vcombine.low %v331, %v343
    %v385 = vcombine.high %v331, %v343
    %v387 = vunpack.c.l.s4 1983009808
    %v388 = vunpack.c.0.s8 %v387
    %v389 = vlaneseq
    %v390 = vshrl.u32 %v389, 7
    %v391 = vsub.s32 %v388, %v390
    %v392 = vrot.slane %v384, %v391
    %v394 = vunpack.c.l.s4 1983009808
    %v395 = vunpack.c.0.s8 %v394
    %v396 = vlaneseq
    %v397 = vshrl.u32 %v396, 7
    %v398 = vsub.s32 %v395, %v397
    %v399 = vrot.slane %v385, %v398
    %v400 = vcombine.low %v325, %v357
    %v401 = vcombine.high %v325, %v357
    %v403 = vunpack.c.l.s4 1983009808
    %v404 = vunpack.c.0.s8 %v403
    %v405 = vlaneseq
    %v406 = vshrl.u32 %v405, 7
    %v407 = vsub.s32 %v404, %v406
    %v408 = vrot.slane %v400, %v407
    %v410 = vunpack.c.l.s4 1983009808
    %v411 = vunpack.c.0.s8 %v410
    %v412 = vlaneseq
    %v413 = vshrl.u32 %v412, 7
    %v414 = vsub.s32 %v411, %v413
    %v415 = vrot.slane %v401, %v414
    %v416 = vcombine.low %v351, %v363
    %v417 = vcombine.high %v351, %v363
    %v419 = vunpack.c.l.s4 1983009808
    %v420 = vunpack.c.0.s8 %v419
    %v421 = vlaneseq
    %v422 = vshrl.u32 %v421, 7
    %v423 = vsub.s32 %v420, %v422
    %v424 = vrot.slane %v416, %v423
    %v426 = vunpack.c.l.s4 1983009808
    %v427 = vunpack.c.0.s8 %v426
    %v428 = vlaneseq
    %v429 = vshrl.u32 %v428, 7
    %v430 = vsub.s32 %v427, %v429
    %v431 = vrot.slane %v417, %v430
    %v432 = vcombine.low %v376, %v392
    %v433 = vcombine.high %v376, %v392
    %v435 = vunpack.c.l.s4 1934713408
    %v436 = vunpack.c.0.s8 %v435
    %v437 = vlaneseq
    %v438 = vshrl.u32 %v437, 7
    %v439 = vsub.s32 %v436, %v438
    %v440 = vrot.slane %v432, %v439
    %v442 = vunpack.c.l.s4 1934713408
    %v443 = vunpack.c.0.s8 %v442
    %v444 = vlaneseq
    %v445 = vshrl.u32 %v444, 7
    %v446 = vsub.s32 %v443, %v445
    %v447 = vrot.slane %v433, %v446
    %v448 = vcombine.low %v383, %v399
    %v449 = vcombine.high %v383, %v399
    %v451 = vunpack.c.l.s4 1934713408
    %v452 = vunpack.c.0.s8 %v451
    %v453 = vlaneseq
    %v454 = vshrl.u32 %v453, 7
    %v455 = vsub.s32 %v452, %v454
    %v456 = vrot.slane %v448, %v455
    %v458 = vunpack.c.l.s4 1934713408
    %v459 = vunpack.c.0.s8 %v458
    %v460 = vlaneseq
    %v461 = vshrl.u32 %v460, 7
    %v462 = vsub.s32 %v459, %v461
    %v463 = vrot.slane %v449, %v462
    %v464 = vcombine.low %v408, %v424
    %v465 = vcombine.high %v408, %v424
    %v467 = vunpack.c.l.s4 1934713408
    %v468 = vunpack.c.0.s8 %v467
    %v469 = vlaneseq
    %v470 = vshrl.u32 %v469, 7
    %v471 = vsub.s32 %v468, %v470
    %v472 = vrot.slane %v464, %v471
    %v474 = vunpack.c.l.s4 1934713408
    %v475 = vunpack.c.0.s8 %v474
    %v476 = vlaneseq
    %v477 = vshrl.u32 %v476, 7
    %v478 = vsub.s32 %v475, %v477
    %v479 = vrot.slane %v465, %v478
    %v480 = vcombine.low %v415, %v431
    %v481 = vcombine.high %v415, %v431
    %v483 = vunpack.c.l.s4 1934713408
    %v484 = vunpack.c.0.s8 %v483
    %v485 = vlaneseq
    %v486 = vshrl.u32 %v485, 7
    %v487 = vsub.s32 %v484, %v486
    %v488 = vrot.slane %v480, %v487
    %v490 = vunpack.c.l.s4 1934713408
    %v491 = vunpack.c.0.s8 %v490
    %v492 = vlaneseq
    %v493 = vshrl.u32 %v492, 7
    %v494 = vsub.s32 %v491, %v493
    %v495 = vrot.slane %v481, %v494
    %v496 = vcombine.low %v440, %v472
    %v497 = vcombine.high %v440, %v472
    %v498 = vcombine.low %v447, %v479
    %v499 = vcombine.high %v447, %v479
    %v500 = vcombine.low %v456, %v488
    %v501 = vcombine.high %v456, %v488
    %v502 = vcombine.low %v463, %v495
    %v503 = vcombine.high %v463, %v495
    %v504 = vcombine.low %v326, %v339
    %v505 = vcombine.high %v326, %v339
    %v507 = vunpack.c.l.s4 1983009808
    %v508 = vunpack.c.0.s8 %v507
    %v509 = vlaneseq
    %v510 = vshrl.u32 %v509, 7
    %v511 = vsub.s32 %v508, %v510
    %v512 = vrot.slane %v504, %v511
    %v514 = vunpack.c.l.s4 1983009808
    %v515 = vunpack.c.0.s8 %v514
    %v516 = vlaneseq
    %v517 = vshrl.u32 %v516, 7
    %v518 = vsub.s32 %v515, %v517
    %v519 = vrot.slane %v505, %v518
    %v520 = vcombine.low %v333, %v345
    %v521 = vcombine.high %v333, %v345
    %v523 = vunpack.c.l.s4 1983009808
    %v524 = vunpack.c.0.s8 %v523
    %v525 = vlaneseq
    %v526 = vshrl.u32 %v525, 7
    %v527 = vsub.s32 %v524, %v526
    %v528 = vrot.slane %v520, %v527
    %v530 = vunpack.c.l.s4 1983009808
    %v531 = vunpack.c.0.s8 %v530
    %v532 = vlaneseq
    %v533 = vshrl.u32 %v532, 7
    %v534 = vsub.s32 %v531, %v533
    %v535 = vrot.slane %v521, %v534
    %v536 = vcombine.low %v327, %v359
    %v537 = vcombine.high %v327, %v359
    %v539 = vunpack.c.l.s4 1983009808
    %v540 = vunpack.c.0.s8 %v539
    %v541 = vlaneseq
    %v542 = vshrl.u32 %v541, 7
    %v543 = vsub.s32 %v540, %v542
    %v544 = vrot.slane %v536, %v543
    %v546 = vunpack.c.l.s4 1983009808
    %v547 = vunpack.c.0.s8 %v546
    %v548 = vlaneseq
    %v549 = vshrl.u32 %v548, 7
    %v550 = vsub.s32 %v547, %v549
    %v551 = vrot.slane %v537, %v550
    %v552 = vcombine.low %v353, %v365
    %v553 = vcombine.high %v353, %v365
    %v555 = vunpack.c.l.s4 1983009808
    %v556 = vunpack.c.0.s8 %v555
    %v557 = vlaneseq
    %v558 = vshrl.u32 %v557, 7
    %v559 = vsub.s32 %v556, %v558
    %v560 = vrot.slane %v552, %v559
    %v562 = vunpack.c.l.s4 1983009808
    %v563 = vunpack.c.0.s8 %v562
    %v564 = vlaneseq
    %v565 = vshrl.u32 %v564, 7
    %v566 = vsub.s32 %v563, %v565
    %v567 = vrot.slane %v553, %v566
    %v568 = vcombine.low %v512, %v528
    %v569 = vcombine.high %v512, %v528
    %v571 = vunpack.c.l.s4 1934713408
    %v572 = vunpack.c.0.s8 %v571
    %v573 = vlaneseq
    %v574 = vshrl.u32 %v573, 7
    %v575 = vsub.s32 %v572, %v574
    %v576 = vrot.slane %v568, %v575
    %v578 = vunpack.c.l.s4 1934713408
    %v579 = vunpack.c.0.s8 %v578
    %v580 = vlaneseq
    %v581 = vshrl.u32 %v580, 7
    %v582 = vsub.s32 %v579, %v581
    %v583 = vrot.slane %v569, %v582
    %v584 = vcombine.low %v519, %v535
    %v585 = vcombine.high %v519, %v535
    %v587 = vunpack.c.l.s4 1934713408
    %v588 = vunpack.c.0.s8 %v587
    %v589 = vlaneseq
    %v590 = vshrl.u32 %v589, 7
    %v591 = vsub.s32 %v588, %v590
    %v592 = vrot.slane %v584, %v591
    %v594 = vunpack.c.l.s4 1934713408
    %v595 = vunpack.c.0.s8 %v594
    %v596 = vlaneseq
    %v597 = vshrl.u32 %v596, 7
    %v598 = vsub.s32 %v595, %v597
    %v599 = vrot.slane %v585, %v598
    %v600 = vcombine.low %v544, %v560
    %v601 = vcombine.high %v544, %v560
    %v603 = vunpack.c.l.s4 1934713408
    %v604 = vunpack.c.0.s8 %v603
    %v605 = vlaneseq
    %v606 = vshrl.u32 %v605, 7
    %v607 = vsub.s32 %v604, %v606
    %v608 = vrot.slane %v600, %v607
    %v610 = vunpack.c.l.s4 1934713408
    %v611 = vunpack.c.0.s8 %v610
    %v612 = vlaneseq
    %v613 = vshrl.u32 %v612, 7
    %v614 = vsub.s32 %v611, %v613
    %v615 = vrot.slane %v601, %v614
    %v616 = vcombine.low %v551, %v567
    %v617 = vcombine.high %v551, %v567
    %v619 = vunpack.c.l.s4 1934713408
    %v620 = vunpack.c.0.s8 %v619
    %v621 = vlaneseq
    %v622 = vshrl.u32 %v621, 7
    %v623 = vsub.s32 %v620, %v622
    %v624 = vrot.slane %v616, %v623
    %v626 = vunpack.c.l.s4 1934713408
    %v627 = vunpack.c.0.s8 %v626
    %v628 = vlaneseq
    %v629 = vshrl.u32 %v628, 7
    %v630 = vsub.s32 %v627, %v629
    %v631 = vrot.slane %v617, %v630
    %v632 = vcombine.low %v576, %v608
    %v633 = vcombine.high %v576, %v608
    %v634 = vcombine.low %v583, %v615
    %v635 = vcombine.high %v583, %v615
    %v636 = vcombine.low %v592, %v624
    %v637 = vcombine.high %v592, %v624
    %v638 = vcombine.low %v599, %v631
    %v639 = vcombine.high %v599, %v631
    %v640 = vcombine.low %v496, %v498
    %v641 = vcombine.high %v496, %v498
    %v643 = vunpack.c.l.s4 1983009808
    %v644 = vunpack.c.0.s8 %v643
    %v645 = vlaneseq
    %v646 = vshrl.u32 %v645, 7
    %v647 = vsub.s32 %v644, %v646
    %v648 = vrot.slane %v640, %v647
    %v650 = vunpack.c.l.s4 1983009808
    %v651 = vunpack.c.0.s8 %v650
    %v652 = vlaneseq
    %v653 = vshrl.u32 %v652, 7
    %v654 = vsub.s32 %v651, %v653
    %v655 = vrot.slane %v641, %v654
    %v656 = vcombine.low %v497, %v499
    %v657 = vcombine.high %v497, %v499
    %v659 = vunpack.c.l.s4 1983009808
    %v660 = vunpack.c.0.s8 %v659
    %v661 = vlaneseq
    %v662 = vshrl.u32 %v661, 7
    %v663 = vsub.s32 %v660, %v662
    %v664 = vrot.slane %v656, %v663
    %v666 = vunpack.c.l.s4 1983009808
    %v667 = vunpack.c.0.s8 %v666
    %v668 = vlaneseq
    %v669 = vshrl.u32 %v668, 7
    %v670 = vsub.s32 %v667, %v669
    %v671 = vrot.slane %v657, %v670
    %v672 = vcombine.low %v500, %v502
    %v673 = vcombine.high %v500, %v502
    %v675 = vunpack.c.l.s4 1983009808
    %v676 = vunpack.c.0.s8 %v675
    %v677 = vlaneseq
    %v678 = vshrl.u32 %v677, 7
    %v679 = vsub.s32 %v676, %v678
    %v680 = vrot.slane %v672, %v679
    %v682 = vunpack.c.l.s4 1983009808
    %v683 = vunpack.c.0.s8 %v682
    %v684 = vlaneseq
    %v685 = vshrl.u32 %v684, 7
    %v686 = vsub.s32 %v683, %v685
    %v687 = vrot.slane %v673, %v686
    %v688 = vcombine.low %v501, %v503
    %v689 = vcombine.high %v501, %v503
    %v691 = vunpack.c.l.s4 1983009808
    %v692 = vunpack.c.0.s8 %v691
    %v693 = vlaneseq
    %v694 = vshrl.u32 %v693, 7
    %v695 = vsub.s32 %v692, %v694
    %v696 = vrot.slane %v688, %v695
    %v698 = vunpack.c.l.s4 1983009808
    %v699 = vunpack.c.0.s8 %v698
    %v700 = vlaneseq
    %v701 = vshrl.u32 %v700, 7
    %v702 = vsub.s32 %v699, %v701
    %v703 = vrot.slane %v689, %v702
    %v704 = vcombine.low %v648, %v664
    %v705 = vcombine.high %v648, %v664
    %v707 = vunpack.c.l.s4 1934713408
    %v708 = vunpack.c.0.s8 %v707
    %v709 = vlaneseq
    %v710 = vshrl.u32 %v709, 7
    %v711 = vsub.s32 %v708, %v710
    %v712 = vrot.slane %v704, %v711
    %v714 = vunpack.c.l.s4 1934713408
    %v715 = vunpack.c.0.s8 %v714
    %v716 = vlaneseq
    %v717 = vshrl.u32 %v716, 7
    %v718 = vsub.s32 %v715, %v717
    %v719 = vrot.slane %v705, %v718
    %v720 = vcombine.low %v655, %v671
    %v721 = vcombine.high %v655, %v671
    %v723 = vunpack.c.l.s4 1934713408
    %v724 = vunpack.c.0.s8 %v723
    %v725 = vlaneseq
    %v726 = vshrl.u32 %v725, 7
    %v727 = vsub.s32 %v724, %v726
    %v728 = vrot.slane %v720, %v727
    %v730 = vunpack.c.l.s4 1934713408
    %v731 = vunpack.c.0.s8 %v730
    %v732 = vlaneseq
    %v733 = vshrl.u32 %v732, 7
    %v734 = vsub.s32 %v731, %v733
    %v735 = vrot.slane %v721, %v734
    %v736 = vcombine.low %v680, %v696
    %v737 = vcombine.high %v680, %v696
    %v739 = vunpack.c.l.s4 1934713408
    %v740 = vunpack.c.0.s8 %v739
    %v741 = vlaneseq
    %v742 = vshrl.u32 %v741, 7
    %v743 = vsub.s32 %v740, %v742
    %v744 = vrot.slane %v736, %v743
    %v746 = vunpack.c.l.s4 1934713408
    %v747 = vunpack.c.0.s8 %v746
    %v748 = vlaneseq
    %v749 = vshrl.u32 %v748, 7
    %v750 = vsub.s32 %v747, %v749
    %v751 = vrot.slane %v737, %v750
    %v752 = vcombine.low %v687, %v703
    %v753 = vcombine.high %v687, %v703
    %v755 = vunpack.c.l.s4 1934713408
    %v756 = vunpack.c.0.s8 %v755
    %v757 = vlaneseq
    %v758 = vshrl.u32 %v757, 7
    %v759 = vsub.s32 %v756, %v758
    %v760 = vrot.slane %v752, %v759
    %v762 = vunpack.c.l.s4 1934713408
    %v763 = vunpack.c.0.s8 %v762
    %v764 = vlaneseq
    %v765 = vshrl.u32 %v764, 7
    %v766 = vsub.s32 %v763, %v765
    %v767 = vrot.slane %v753, %v766
    %v768 = vcombine.low %v712, %v744
    %v769 = vcombine.high %v712, %v744
    %v770 = vcombine.low %v719, %v751
    %v771 = vcombine.high %v719, %v751
    %v772 = vcombine.low %v728, %v760
    %v773 = vcombine.high %v728, %v760
    %v774 = vcombine.low %v735, %v767
    %v775 = vcombine.high %v735, %v767
    %v776 = vcombine.low %v632, %v634
    %v777 = vcombine.high %v632, %v634
    %v779 = vunpack.c.l.s4 1983009808
    %v780 = vunpack.c.0.s8 %v779
    %v781 = vlaneseq
    %v782 = vshrl.u32 %v781, 7
    %v783 = vsub.s32 %v780, %v782
    %v784 = vrot.slane %v776, %v783
    %v786 = vunpack.c.l.s4 1983009808
    %v787 = vunpack.c.0.s8 %v786
    %v788 = vlaneseq
    %v789 = vshrl.u32 %v788, 7
    %v790 = vsub.s32 %v787, %v789
    %v791 = vrot.slane %v777, %v790
    %v792 = vcombine.low %v633, %v635
    %v793 = vcombine.high %v633, %v635
    %v795 = vunpack.c.l.s4 1983009808
    %v796 = vunpack.c.0.s8 %v795
    %v797 = vlaneseq
    %v798 = vshrl.u32 %v797, 7
    %v799 = vsub.s32 %v796, %v798
    %v800 = vrot.slane %v792, %v799
    %v802 = vunpack.c.l.s4 1983009808
    %v803 = vunpack.c.0.s8 %v802
    %v804 = vlaneseq
    %v805 = vshrl.u32 %v804, 7
    %v806 = vsub.s32 %v803, %v805
    %v807 = vrot.slane %v793, %v806
    %v808 = vcombine.low %v636, %v638
    %v809 = vcombine.high %v636, %v638
    %v811 = vunpack.c.l.s4 1983009808
    %v812 = vunpack.c.0.s8 %v811
    %v813 = vlaneseq
    %v814 = vshrl.u32 %v813, 7
    %v815 = vsub.s32 %v812, %v814
    %v816 = vrot.slane %v808, %v815
    %v818 = vunpack.c.l.s4 1983009808
    %v819 = vunpack.c.0.s8 %v818
    %v820 = vlaneseq
    %v821 = vshrl.u32 %v820, 7
    %v822 = vsub.s32 %v819, %v821
    %v823 = vrot.slane %v809, %v822
    %v824 = vcombine.low %v637, %v639
    %v825 = vcombine.high %v637, %v639
    %v827 = vunpack.c.l.s4 1983009808
    %v828 = vunpack.c.0.s8 %v827
    %v829 = vlaneseq
    %v830 = vshrl.u32 %v829, 7
    %v831 = vsub.s32 %v828, %v830
    %v832 = vrot.slane %v824, %v831
    %v834 = vunpack.c.l.s4 1983009808
    %v835 = vunpack.c.0.s8 %v834
    %v836 = vlaneseq
    %v837 = vshrl.u32 %v836, 7
    %v838 = vsub.s32 %v835, %v837
    %v839 = vrot.slane %v825, %v838
    %v840 = vcombine.low %v784, %v800
    %v841 = vcombine.high %v784, %v800
    %v843 = vunpack.c.l.s4 1934713408
    %v844 = vunpack.c.0.s8 %v843
    %v845 = vlaneseq
    %v846 = vshrl.u32 %v845, 7
    %v847 = vsub.s32 %v844, %v846
    %v848 = vrot.slane %v840, %v847
    %v850 = vunpack.c.l.s4 1934713408
    %v851 = vunpack.c.0.s8 %v850
    %v852 = vlaneseq
    %v853 = vshrl.u32 %v852, 7
    %v854 = vsub.s32 %v851, %v853
    %v855 = vrot.slane %v841, %v854
    %v856 = vcombine.low %v791, %v807
    %v857 = vcombine.high %v791, %v807
    %v859 = vunpack.c.l.s4 1934713408
    %v860 = vunpack.c.0.s8 %v859
    %v861 = vlaneseq
    %v862 = vshrl.u32 %v861, 7
    %v863 = vsub.s32 %v860, %v862
    %v864 = vrot.slane %v856, %v863
    %v866 = vunpack.c.l.s4 1934713408
    %v867 = vunpack.c.0.s8 %v866
    %v868 = vlaneseq
    %v869 = vshrl.u32 %v868, 7
    %v870 = vsub.s32 %v867, %v869
    %v871 = vrot.slane %v857, %v870
    %v872 = vcombine.low %v816, %v832
    %v873 = vcombine.high %v816, %v832
    %v875 = vunpack.c.l.s4 1934713408
    %v876 = vunpack.c.0.s8 %v875
    %v877 = vlaneseq
    %v878 = vshrl.u32 %v877, 7
    %v879 = vsub.s32 %v876, %v878
    %v880 = vrot.slane %v872, %v879
    %v882 = vunpack.c.l.s4 1934713408
    %v883 = vunpack.c.0.s8 %v882
    %v884 = vlaneseq
    %v885 = vshrl.u32 %v884, 7
    %v886 = vsub.s32 %v883, %v885
    %v887 = vrot.slane %v873, %v886
    %v888 = vcombine.low %v823, %v839
    %v889 = vcombine.high %v823, %v839
    %v891 = vunpack.c.l.s4 1934713408
    %v892 = vunpack.c.0.s8 %v891
    %v893 = vlaneseq
    %v894 = vshrl.u32 %v893, 7
    %v895 = vsub.s32 %v892, %v894
    %v896 = vrot.slane %v888, %v895
    %v898 = vunpack.c.l.s4 1934713408
    %v899 = vunpack.c.0.s8 %v898
    %v900 = vlaneseq
    %v901 = vshrl.u32 %v900, 7
    %v902 = vsub.s32 %v899, %v901
    %v903 = vrot.slane %v889, %v902
    %v904 = vcombine.low %v848, %v880
    %v905 = vcombine.high %v848, %v880
    %v906 = vcombine.low %v855, %v887
    %v907 = vcombine.high %v855, %v887
    %v908 = vcombine.low %v864, %v896
    %v909 = vcombine.high %v864, %v896
    %v910 = vcombine.low %v871, %v903
    %v911 = vcombine.high %v871, %v903
    %v912 = vpack.c.bf16 %v904, %v768
    %v913 = vpack.c.bf16 %v905, %v769
    %v914 = vpack.c.bf16 %v906, %v770
    %v915 = vpack.c.bf16 %v907, %v771
    %v916 = vpack.c.bf16 %v908, %v772
    %v917 = vpack.c.bf16 %v909, %v773
    %vm918 = vcmask 261120
    %v920 = vsel %vm918, %v912, 0
    %v923 = vsel %vm918, %v913, 0
    %v926 = vsel %vm918, %v916, 0
    %928 = vmatprep.subr.bf16.mxu0 0
    %929 = vmatpush1.bf16.xpose.msra.mxu0 %v926
    %930 = vmatprep.subr.bf16.mxu0 0
    %931 = vmatpush1.bf16.xpose.msra.mxu0 0
    %932 = vmatprep.subr.bf16.mxu0 0
    %933 = vmatpush1.bf16.xpose.msra.mxu0 0
    %934 = vmatprep.subr.bf16.mxu0 0
    %935 = vmatpush1.bf16.xpose.msra.mxu0 0
    %936 = vmatprep.subr.bf16.mxu0 0
    %937 = vmatpush1.bf16.xpose.msra.mxu0 0
    %938 = vmatprep.subr.bf16.mxu0 0
    %939 = vmatpush1.bf16.xpose.msra.mxu0 0
    %940 = vmatprep.subr.bf16.mxu0 0
    %941 = vmatpush1.bf16.xpose.msra.mxu0 0
    %942 = vmatprep.subr.bf16.mxu0 0
    %943 = vmatpush1.bf16.xpose.msra.mxu0 0
    %944 = vmatprep.subr.bf16.mxu0 0
    %945 = vmatpush1.bf16.xpose.msra.mxu0 0
    %946 = vmatprep.subr.bf16.mxu0 0
    %947 = vmatpush1.bf16.xpose.msra.mxu0 0
    %948 = vmatprep.subr.bf16.mxu0 0
    %949 = vmatpush1.bf16.xpose.msra.mxu0 0
    %950 = vmatprep.subr.bf16.mxu0 0
    %951 = vmatpush1.bf16.xpose.msra.mxu0 0
    %952 = vmatprep.subr.bf16.mxu0 0
    %953 = vmatpush1.bf16.xpose.msra.mxu0 0
    %954 = vmatprep.subr.bf16.mxu0 0
    %955 = vmatpush1.bf16.xpose.msra.mxu0 0
    %956 = vmatprep.subr.bf16.mxu0 0
    %957 = vmatpush1.bf16.xpose.msra.mxu0 0
    %958 = vmatprep.subr.bf16.mxu0 0
    %959 = vmatpush1.bf16.xpose.msra.mxu0 0
    %960 = vmatprep.mubr.bf16.mxu0 0
    %961 = vmatmul.mubr.bf16.gmra.mrb[0].mxu0 %v920
    %v962 = vpop.f32.mrb[0].mxu0
    %v963 = vadd.f32 0.0, %v962
    %v964 = vpop.f32.mrb[0].mxu0
    %v965 = vpop.f32.mrb[0].mxu0
    %v966 = vadd.f32 0.0, %v965
    %v967 = vpop.f32.mrb[0].mxu0
    %968 = vmatprep.mubr.bf16.mxu0 0
    %969 = vmatmul.mubr.bf16.gmra.mrb[0].mxu0 %v923
    %v970 = vpop.f32.mrb[0].mxu0
    %v971 = vadd.f32 0.0, %v970
    %v972 = vpop.f32.mrb[0].mxu0
    %v973 = vpop.f32.mrb[0].mxu0
    %v974 = vadd.f32 0.0, %v973
    %v975 = vpop.f32.mrb[0].mxu0
    %976 = vdwg.mxu0
    %v978 = vsel %vm918, %v914, 0
    %v981 = vsel %vm918, %v915, 0
    %v984 = vsel %vm918, %v917, 0
    %986 = vmatprep.subr.bf16.mxu0 0
    %987 = vmatpush1.bf16.xpose.msra.mxu0 %v984
    %988 = vmatprep.subr.bf16.mxu0 0
    %989 = vmatpush1.bf16.xpose.msra.mxu0 0
    %990 = vmatprep.subr.bf16.mxu0 0
    %991 = vmatpush1.bf16.xpose.msra.mxu0 0
    %992 = vmatprep.subr.bf16.mxu0 0
    %993 = vmatpush1.bf16.xpose.msra.mxu0 0
    %994 = vmatprep.subr.bf16.mxu0 0
    %995 = vmatpush1.bf16.xpose.msra.mxu0 0
    %996 = vmatprep.subr.bf16.mxu0 0
    %997 = vmatpush1.bf16.xpose.msra.mxu0 0
    %998 = vmatprep.subr.bf16.mxu0 0
    %999 = vmatpush1.bf16.xpose.msra.mxu0 0
    %1000 = vmatprep.subr.bf16.mxu0 0
    %1001 = vmatpush1.bf16.xpose.msra.mxu0 0
    %1002 = vmatprep.subr.bf16.mxu0 0
    %1003 = vmatpush1.bf16.xpose.msra.mxu0 0
    %1004 = vmatprep.subr.bf16.mxu0 0
    %1005 = vmatpush1.bf16.xpose.msra.mxu0 0
    %1006 = vmatprep.subr.bf16.mxu0 0
    %1007 = vmatpush1.bf16.xpose.msra.mxu0 0
    %1008 = vmatprep.subr.bf16.mxu0 0
    %1009 = vmatpush1.bf16.xpose.msra.mxu0 0
    %1010 = vmatprep.subr.bf16.mxu0 0
    %1011 = vmatpush1.bf16.xpose.msra.mxu0 0
    %1012 = vmatprep.subr.bf16.mxu0 0
    %1013 = vmatpush1.bf16.xpose.msra.mxu0 0
    %1014 = vmatprep.subr.bf16.mxu0 0
    %1015 = vmatpush1.bf16.xpose.msra.mxu0 0
    %1016 = vmatprep.subr.bf16.mxu0 0
    %1017 = vmatpush1.bf16.xpose.msra.mxu0 0
    %1018 = vmatprep.mubr.bf16.mxu0 0
    %1019 = vmatmul.mubr.bf16.gmra.mrb[0].mxu0 %v978
    %v1020 = vpop.f32.mrb[0].mxu0
    %v1021 = vadd.f32 0.0, %v1020
    %v1022 = vpop.f32.mrb[0].mxu0
    %v1023 = vpop.f32.mrb[0].mxu0
    %v1024 = vadd.f32 0.0, %v1023
    %v1025 = vpop.f32.mrb[0].mxu0
    %1026 = vmatprep.mubr.bf16.mxu0 0
    %1027 = vmatmul.mubr.bf16.gmra.mrb[0].mxu0 %v981
    %v1028 = vpop.f32.mrb[0].mxu0
    %v1029 = vadd.f32 0.0, %v1028
    %v1030 = vpop.f32.mrb[0].mxu0
    %v1031 = vpop.f32.mrb[0].mxu0
    %v1032 = vadd.f32 0.0, %v1031
    %v1033 = vpop.f32.mrb[0].mxu0
    %1034 = vdwg.mxu0
    %v1035 = vmul.f32 %v963, 0.17677669
    %v1036 = vmul.f32 %v966, 0.17677669
    %v1037 = vmul.f32 %v971, 0.17677669
    %v1038 = vmul.f32 %v974, 0.17677669
    %v1039 = vmul.f32 %v1021, 0.17677669
    %v1040 = vmul.f32 %v1024, 0.17677669
    %v1041 = vmul.f32 %v1029, 0.17677669
    %v1042 = vmul.f32 %v1032, 0.17677669
    %v1043 = vlaneseq
    %v1044 = vshrl.u32 %v1043, 7
    %v1045 = vadd.s32 %v1044, 8
    %v1046 = vadd.s32 %v1044, 16
    %v1047 = vadd.s32 %v1044, 24
    %vm1048 = vcmp.lt.s32.totalorder %v1044, 0
    %v1049 = vsub.s32 0, %v1044
    %v1050 = vsel %vm1048, %v1049, %v1044
    %v1051 = vshrl.u32 %v1050, 4
    %v1052 = vand.u32 %v1050, 15
    %v1053 = vsub.s32 0, %v1052
    %v1054 = vsel %vm1048, %v1053, %v1052
    %vm1055 = vcmp.lt.s32.totalorder %v1045, 0
    %v1056 = vsub.s32 0, %v1045
    %v1057 = vsel %vm1055, %v1056, %v1045
    %v1058 = vshrl.u32 %v1057, 4
    %v1059 = vand.u32 %v1057, 15
    %v1060 = vsub.s32 0, %v1059
    %v1061 = vsel %vm1055, %v1060, %v1059
    %vm1062 = vcmp.lt.s32.totalorder %v1046, 0
    %v1063 = vsub.s32 0, %v1046
    %v1064 = vsel %vm1062, %v1063, %v1046
    %v1065 = vshrl.u32 %v1064, 4
    %v1066 = vand.u32 %v1064, 15
    %v1067 = vsub.s32 0, %v1066
    %v1068 = vsel %vm1062, %v1067, %v1066
    %vm1069 = vcmp.lt.s32.totalorder %v1047, 0
    %v1070 = vsub.s32 0, %v1047
    %v1071 = vsel %vm1069, %v1070, %v1047
    %v1072 = vshrl.u32 %v1071, 4
    %v1073 = vand.u32 %v1071, 15
    %v1074 = vsub.s32 0, %v1073
    %v1075 = vsel %vm1069, %v1074, %v1073
    %vm1076 = vcmp.ne.s32.totalorder %v1054, 0
    %vm1077 = vcmp.ne.s32.totalorder %v1061, 0
    %vm1078 = vcmp.ne.s32.totalorder %v1068, 0
    %vm1079 = vcmp.ne.s32.totalorder %v1075, 0
    %vm1080 = vcmp.lt.s32.totalorder %v1054, 0
    %vm1081 = vcmp.lt.s32.totalorder %v1061, 0
    %vm1082 = vcmp.lt.s32.totalorder %v1068, 0
    %vm1083 = vcmp.lt.s32.totalorder %v1075, 0
    %vm1084 = vmand %vm1080, %vm1076
    %vm1085 = vmand %vm1081, %vm1077
    %vm1086 = vmand %vm1082, %vm1078
    %vm1087 = vmand %vm1083, %vm1079
    %v1088 = vadd.s32 %v1054, 16
    %v1089 = vadd.s32 %v1061, 16
    %v1090 = vadd.s32 %v1068, 16
    %v1091 = vadd.s32 %v1075, 16
    %v1092 = vsel %vm1084, %v1088, %v1054
    %v1093 = vsel %vm1085, %v1089, %v1061
    %v1094 = vsel %vm1086, %v1090, %v1068
    %v1095 = vsel %vm1087, %v1091, %v1075
    %v1096 = vlaneseq
    %v1097 = vand.u32 %v1096, 127
    %vm1098 = vcmp.ge.s32.totalorder %v1092, %v1097
    %vm1099 = vcmp.ge.s32.totalorder %v1093, %v1097
    %vm1100 = vcmp.ge.s32.totalorder %v1094, %v1097
    %vm1101 = vcmp.ge.s32.totalorder %v1095, %v1097
    %v1102 = vsel %vm1098, 0.0, -1e+30
    %v1103 = vsel %vm1099, 0.0, -1e+30
    %v1104 = vsel %vm1100, 0.0, -1e+30
    %v1105 = vsel %vm1101, 0.0, -1e+30
    %v1106 = vadd.f32 %v1035, %v1102
    %v1107 = vadd.f32 %v1036, %v1103
    %v1108 = vadd.f32 %v1037, %v1104
    %v1109 = vadd.f32 %v1038, %v1105
    %v1110 = vadd.f32 %v1039, %v1102
    %v1111 = vadd.f32 %v1040, %v1103
    %v1112 = vadd.f32 %v1041, %v1104
    %v1113 = vadd.f32 %v1042, %v1105
    %vm1114 = vcmask 130048
    %v1115 = vsel %vm1114, %v1106, -inf
    %1116 = vmax.xlane.f32.xlu0 %v1115
    %v1117 = vpop.xlane.xlu0 %1116
    %v1118 = vsel %vm1114, %v1107, -inf
    %1119 = vmax.xlane.f32.xlu0 %v1118
    %v1120 = vpop.xlane.xlu0 %1119
    %v1121 = vsel %vm1114, %v1108, -inf
    %1122 = vmax.xlane.f32.xlu0 %v1121
    %v1123 = vpop.xlane.xlu0 %1122
    %v1124 = vsel %vm1114, %v1109, -inf
    %1125 = vmax.xlane.f32.xlu0 %v1124
    %v1126 = vpop.xlane.xlu0 %1125
    %v1127 = vsel %vm1114, %v1110, -inf
    %1128 = vmax.xlane.f32.xlu0 %v1127
    %v1129 = vpop.xlane.xlu0 %1128
    %v1130 = vsel %vm1114, %v1111, -inf
    %1131 = vmax.xlane.f32.xlu0 %v1130
    %v1132 = vpop.xlane.xlu0 %1131
    %v1133 = vsel %vm1114, %v1112, -inf
    %1134 = vmax.xlane.f32.xlu0 %v1133
    %v1135 = vpop.xlane.xlu0 %1134
    %v1136 = vsel %vm1114, %v1113, -inf
    %1137 = vmax.xlane.f32.xlu0 %v1136
    %v1138 = vpop.xlane.xlu0 %1137
    %v1139 = vsub.f32 %v1106, %v1117
    %v1140 = vsub.f32 %v1107, %v1120
    %v1141 = vsub.f32 %v1108, %v1123
    %v1142 = vsub.f32 %v1109, %v1126
    %v1143 = vsub.f32 %v1110, %v1129
    %v1144 = vsub.f32 %v1111, %v1132
    %v1145 = vsub.f32 %v1112, %v1135
    %v1146 = vsub.f32 %v1113, %v1138
    %v1147 = vmul.f32 %v1139, 1.442695
    %v1148 = vpow.pop %v1147
    %v1149 = vmul.f32 %v1140, 1.442695
    %v1150 = vpow.pop %v1149
    %v1151 = vmul.f32 %v1141, 1.442695
    %v1152 = vpow.pop %v1151
    %v1153 = vmul.f32 %v1142, 1.442695
    %v1154 = vpow.pop %v1153
    %v1155 = vmul.f32 %v1143, 1.442695
    %v1156 = vpow.pop %v1155
    %v1157 = vmul.f32 %v1144, 1.442695
    %v1158 = vpow.pop %v1157
    %v1159 = vmul.f32 %v1145, 1.442695
    %v1160 = vpow.pop %v1159
    %v1161 = vmul.f32 %v1146, 1.442695
    %v1162 = vpow.pop %v1161
    %v1163 = vsel %vm1114, %v1148, 0.0
    %1164 = vadd.xlane.f32.xlu0 %v1163
    %v1165 = vpop.xlane.xlu0 %1164
    %v1166 = vsel %vm1114, %v1150, 0.0
    %1167 = vadd.xlane.f32.xlu0 %v1166
    %v1168 = vpop.xlane.xlu0 %1167
    %v1169 = vsel %vm1114, %v1152, 0.0
    %1170 = vadd.xlane.f32.xlu0 %v1169
    %v1171 = vpop.xlane.xlu0 %1170
    %v1172 = vsel %vm1114, %v1154, 0.0
    %1173 = vadd.xlane.f32.xlu0 %v1172
    %v1174 = vpop.xlane.xlu0 %1173
    %v1175 = vsel %vm1114, %v1156, 0.0
    %1176 = vadd.xlane.f32.xlu0 %v1175
    %v1177 = vpop.xlane.xlu0 %1176
    %v1178 = vsel %vm1114, %v1158, 0.0
    %1179 = vadd.xlane.f32.xlu0 %v1178
    %v1180 = vpop.xlane.xlu0 %1179
    %v1181 = vsel %vm1114, %v1160, 0.0
    %1182 = vadd.xlane.f32.xlu0 %v1181
    %v1183 = vpop.xlane.xlu0 %1182
    %v1184 = vsel %vm1114, %v1162, 0.0
    %1185 = vadd.xlane.f32.xlu0 %v1184
    %v1186 = vpop.xlane.xlu0 %1185
    %v1187 = vrcp.pop %v1165
    %v1188 = vrcp.pop %v1168
    %v1189 = vrcp.pop %v1171
    %v1190 = vrcp.pop %v1174
    %v1191 = vrcp.pop %v1177
    %v1192 = vrcp.pop %v1180
    %v1193 = vrcp.pop %v1183
    %v1194 = vrcp.pop %v1186
    %v1195 = vmul.f32 %v1148, %v1187
    %v1196 = vmul.f32 %v1150, %v1188
    %v1197 = vmul.f32 %v1152, %v1189
    %v1198 = vmul.f32 %v1154, %v1190
    %v1199 = vmul.f32 %v1156, %v1191
    %v1200 = vmul.f32 %v1158, %v1192
    %v1201 = vmul.f32 %v1160, %v1193
    %v1202 = vmul.f32 %v1162, %v1194
    %v1203 = vpack.c.bf16 %v1196, %v1195
    %v1204 = vpack.c.bf16 %v1198, %v1197
    %v1205 = vpack.c.bf16 %v1200, %v1199
    %v1206 = vpack.c.bf16 %v1202, %v1201
    %v1207 = vpack.c.bf16 %v910, %v774
    %v1208 = vpack.c.bf16 %v911, %v775
    %v1210 = vsel %vm1114, %v1203, 0
    %v1213 = vsel %vm1114, %v1204, 0
    %1215 = vmatprep.subr.bf16.mxu0 0
    %1216 = vmatpush1.bf16.msra.mxu0 %v1207
    %1217 = vmatprep.subr.bf16.mxu0 0
    %1218 = vmatpush1.bf16.msra.mxu0 0
    %1219 = vmatprep.subr.bf16.mxu0 0
    %1220 = vmatpush1.bf16.msra.mxu0 0
    %1221 = vmatprep.subr.bf16.mxu0 0
    %1222 = vmatpush1.bf16.msra.mxu0 0
    %1223 = vmatprep.subr.bf16.mxu0 0
    %1224 = vmatpush1.bf16.msra.mxu0 0
    %1225 = vmatprep.subr.bf16.mxu0 0
    %1226 = vmatpush1.bf16.msra.mxu0 0
    %1227 = vmatprep.subr.bf16.mxu0 0
    %1228 = vmatpush1.bf16.msra.mxu0 0
    %1229 = vmatprep.subr.bf16.mxu0 0
    %1230 = vmatpush1.bf16.msra.mxu0 0
    %1231 = vmatprep.subr.bf16.mxu0 0
    %1232 = vmatpush1.bf16.msra.mxu0 0
    %1233 = vmatprep.subr.bf16.mxu0 0
    %1234 = vmatpush1.bf16.msra.mxu0 0
    %1235 = vmatprep.subr.bf16.mxu0 0
    %1236 = vmatpush1.bf16.msra.mxu0 0
    %1237 = vmatprep.subr.bf16.mxu0 0
    %1238 = vmatpush1.bf16.msra.mxu0 0
    %1239 = vmatprep.subr.bf16.mxu0 0
    %1240 = vmatpush1.bf16.msra.mxu0 0
    %1241 = vmatprep.subr.bf16.mxu0 0
    %1242 = vmatpush1.bf16.msra.mxu0 0
    %1243 = vmatprep.subr.bf16.mxu0 0
    %1244 = vmatpush1.bf16.msra.mxu0 0
    %1245 = vmatprep.subr.bf16.mxu0 0
    %1246 = vmatpush1.bf16.msra.mxu0 0
    %1247 = vmatprep.mubr.bf16.mxu0 0
    %1248 = vmatmul.mubr.bf16.gmra.mrb[0].mxu0 %v1210
    %v1249 = vpop.f32.mrb[0].mxu0
    %v1250 = vadd.f32 0.0, %v1249
    %v1251 = vpop.f32.mrb[0].mxu0
    %v1252 = vpop.f32.mrb[0].mxu0
    %v1253 = vadd.f32 0.0, %v1252
    %v1254 = vpop.f32.mrb[0].mxu0
    %1255 = vmatprep.mubr.bf16.mxu0 0
    %1256 = vmatmul.mubr.bf16.gmra.mrb[0].mxu0 %v1213
    %v1257 = vpop.f32.mrb[0].mxu0
    %v1258 = vadd.f32 0.0, %v1257
    %v1259 = vpop.f32.mrb[0].mxu0
    %v1260 = vpop.f32.mrb[0].mxu0
    %v1261 = vadd.f32 0.0, %v1260
    %v1262 = vpop.f32.mrb[0].mxu0
    %1263 = vdwg.mxu0
    %v1265 = vsel %vm1114, %v1205, 0
    %v1268 = vsel %vm1114, %v1206, 0
    %1270 = vmatprep.subr.bf16.mxu0 0
    %1271 = vmatpush1.bf16.msra.mxu0 %v1208
    %1272 = vmatprep.subr.bf16.mxu0 0
    %1273 = vmatpush1.bf16.msra.mxu0 0
    %1274 = vmatprep.subr.bf16.mxu0 0
    %1275 = vmatpush1.bf16.msra.mxu0 0
    %1276 = vmatprep.subr.bf16.mxu0 0
    %1277 = vmatpush1.bf16.msra.mxu0 0
    %1278 = vmatprep.subr.bf16.mxu0 0
    %1279 = vmatpush1.bf16.msra.mxu0 0
    %1280 = vmatprep.subr.bf16.mxu0 0
    %1281 = vmatpush1.bf16.msra.mxu0 0
    %1282 = vmatprep.subr.bf16.mxu0 0
    %1283 = vmatpush1.bf16.msra.mxu0 0
    %1284 = vmatprep.subr.bf16.mxu0 0
    %1285 = vmatpush1.bf16.msra.mxu0 0
    %1286 = vmatprep.subr.bf16.mxu0 0
    %1287 = vmatpush1.bf16.msra.mxu0 0
    %1288 = vmatprep.subr.bf16.mxu0 0
    %1289 = vmatpush1.bf16.msra.mxu0 0
    %1290 = vmatprep.subr.bf16.mxu0 0
    %1291 = vmatpush1.bf16.msra.mxu0 0
    %1292 = vmatprep.subr.bf16.mxu0 0
    %1293 = vmatpush1.bf16.msra.mxu0 0
    %1294 = vmatprep.subr.bf16.mxu0 0
    %1295 = vmatpush1.bf16.msra.mxu0 0
    %1296 = vmatprep.subr.bf16.mxu0 0
    %1297 = vmatpush1.bf16.msra.mxu0 0
    %1298 = vmatprep.subr.bf16.mxu0 0
    %1299 = vmatpush1.bf16.msra.mxu0 0
    %1300 = vmatprep.subr.bf16.mxu0 0
    %1301 = vmatpush1.bf16.msra.mxu0 0
    %1302 = vmatprep.mubr.bf16.mxu0 0
    %1303 = vmatmul.mubr.bf16.gmra.mrb[0].mxu0 %v1265
    %v1304 = vpop.f32.mrb[0].mxu0
    %v1305 = vadd.f32 0.0, %v1304
    %v1306 = vpop.f32.mrb[0].mxu0
    %v1307 = vpop.f32.mrb[0].mxu0
    %v1308 = vadd.f32 0.0, %v1307
    %v1309 = vpop.f32.mrb[0].mxu0
    %1310 = vmatprep.mubr.bf16.mxu0 0
    %1311 = vmatmul.mubr.bf16.gmra.mrb[0].mxu0 %v1268
    %v1312 = vpop.f32.mrb[0].mxu0
    %v1313 = vadd.f32 0.0, %v1312
    %v1314 = vpop.f32.mrb[0].mxu0
    %v1315 = vpop.f32.mrb[0].mxu0
    %v1316 = vadd.f32 0.0, %v1315
    %v1317 = vpop.f32.mrb[0].mxu0
    %1318 = vdwg.mxu0
    %v1319 = vcombine.low %v1250, %v1305
    %v1320 = vcombine.high %v1250, %v1305
    %v1322 = vunpack.c.l.s4 1983009808
    %v1323 = vunpack.c.0.s8 %v1322
    %v1324 = vlaneseq
    %v1325 = vshrl.u32 %v1324, 7
    %v1326 = vsub.s32 %v1323, %v1325
    %v1327 = vrot.slane %v1319, %v1326
    %v1329 = vunpack.c.l.s4 1983009808
    %v1330 = vunpack.c.0.s8 %v1329
    %v1331 = vlaneseq
    %v1332 = vshrl.u32 %v1331, 7
    %v1333 = vsub.s32 %v1330, %v1332
    %v1334 = vrot.slane %v1320, %v1333
    %v1335 = vcombine.low %v1258, %v1313
    %v1336 = vcombine.high %v1258, %v1313
    %v1338 = vunpack.c.l.s4 1983009808
    %v1339 = vunpack.c.0.s8 %v1338
    %v1340 = vlaneseq
    %v1341 = vshrl.u32 %v1340, 7
    %v1342 = vsub.s32 %v1339, %v1341
    %v1343 = vrot.slane %v1335, %v1342
    %v1345 = vunpack.c.l.s4 1983009808
    %v1346 = vunpack.c.0.s8 %v1345
    %v1347 = vlaneseq
    %v1348 = vshrl.u32 %v1347, 7
    %v1349 = vsub.s32 %v1346, %v1348
    %v1350 = vrot.slane %v1336, %v1349
    %v1351 = vcombine.low %v1327, %v1343
    %v1352 = vcombine.high %v1327, %v1343
    %v1354 = vunpack.c.l.s4 1934713408
    %v1355 = vunpack.c.0.s8 %v1354
    %v1356 = vlaneseq
    %v1357 = vshrl.u32 %v1356, 7
    %v1358 = vsub.s32 %v1355, %v1357
    %v1359 = vrot.slane %v1351, %v1358
    %v1361 = vunpack.c.l.s4 1934713408
    %v1362 = vunpack.c.0.s8 %v1361
    %v1363 = vlaneseq
    %v1364 = vshrl.u32 %v1363, 7
    %v1365 = vsub.s32 %v1362, %v1364
    %v1366 = vrot.slane %v1352, %v1365
    %v1367 = vcombine.low %v1334, %v1350
    %v1368 = vcombine.high %v1334, %v1350
    %v1370 = vunpack.c.l.s4 1934713408
    %v1371 = vunpack.c.0.s8 %v1370
    %v1372 = vlaneseq
    %v1373 = vshrl.u32 %v1372, 7
    %v1374 = vsub.s32 %v1371, %v1373
    %v1375 = vrot.slane %v1367, %v1374
    %v1377 = vunpack.c.l.s4 1934713408
    %v1378 = vunpack.c.0.s8 %v1377
    %v1379 = vlaneseq
    %v1380 = vshrl.u32 %v1379, 7
    %v1381 = vsub.s32 %v1378, %v1380
    %v1382 = vrot.slane %v1368, %v1381
    %v1383 = vcombine.high %v1359, 0.0
    %v1384 = vcombine.high %v1366, 0.0
    %v1385 = vcombine.high %v1375, 0.0
    %v1386 = vcombine.high %v1382, 0.0
    %v1387 = vcombine.low %v1253, %v1308
    %v1388 = vcombine.high %v1253, %v1308
    %v1390 = vunpack.c.l.s4 1983009808
    %v1391 = vunpack.c.0.s8 %v1390
    %v1392 = vlaneseq
    %v1393 = vshrl.u32 %v1392, 7
    %v1394 = vsub.s32 %v1391, %v1393
    %v1395 = vrot.slane %v1387, %v1394
    %v1397 = vunpack.c.l.s4 1983009808
    %v1398 = vunpack.c.0.s8 %v1397
    %v1399 = vlaneseq
    %v1400 = vshrl.u32 %v1399, 7
    %v1401 = vsub.s32 %v1398, %v1400
    %v1402 = vrot.slane %v1388, %v1401
    %v1403 = vcombine.low %v1261, %v1316
    %v1404 = vcombine.high %v1261, %v1316
    %v1406 = vunpack.c.l.s4 1983009808
    %v1407 = vunpack.c.0.s8 %v1406
    %v1408 = vlaneseq
    %v1409 = vshrl.u32 %v1408, 7
    %v1410 = vsub.s32 %v1407, %v1409
    %v1411 = vrot.slane %v1403, %v1410
    %v1413 = vunpack.c.l.s4 1983009808
    %v1414 = vunpack.c.0.s8 %v1413
    %v1415 = vlaneseq
    %v1416 = vshrl.u32 %v1415, 7
    %v1417 = vsub.s32 %v1414, %v1416
    %v1418 = vrot.slane %v1404, %v1417
    %v1419 = vcombine.low %v1395, %v1411
    %v1420 = vcombine.high %v1395, %v1411
    %v1422 = vunpack.c.l.s4 1934713408
    %v1423 = vunpack.c.0.s8 %v1422
    %v1424 = vlaneseq
    %v1425 = vshrl.u32 %v1424, 7
    %v1426 = vsub.s32 %v1423, %v1425
    %v1427 = vrot.slane %v1419, %v1426
    %v1429 = vunpack.c.l.s4 1934713408
    %v1430 = vunpack.c.0.s8 %v1429
    %v1431 = vlaneseq
    %v1432 = vshrl.u32 %v1431, 7
    %v1433 = vsub.s32 %v1430, %v1432
    %v1434 = vrot.slane %v1420, %v1433
    %v1435 = vcombine.low %v1402, %v1418
    %v1436 = vcombine.high %v1402, %v1418
    %v1438 = vunpack.c.l.s4 1934713408
    %v1439 = vunpack.c.0.s8 %v1438
    %v1440 = vlaneseq
    %v1441 = vshrl.u32 %v1440, 7
    %v1442 = vsub.s32 %v1439, %v1441
    %v1443 = vrot.slane %v1435, %v1442
    %v1445 = vunpack.c.l.s4 1934713408
    %v1446 = vunpack.c.0.s8 %v1445
    %v1447 = vlaneseq
    %v1448 = vshrl.u32 %v1447, 7
    %v1449 = vsub.s32 %v1446, %v1448
    %v1450 = vrot.slane %v1436, %v1449
    %v1451 = vcombine.high %v1427, 0.0
    %v1452 = vcombine.high %v1434, 0.0
    %v1453 = vcombine.high %v1443, 0.0
    %v1454 = vcombine.high %v1450, 0.0
    %v1455 = vcombine.low %v1359, %v1366
    %v1457 = vunpack.c.l.s4 1983009808
    %v1458 = vunpack.c.0.s8 %v1457
    %v1459 = vlaneseq
    %v1460 = vshrl.u32 %v1459, 7
    %v1461 = vsub.s32 %v1458, %v1460
    %v1462 = vrot.slane %v1455, %v1461
    %v1463 = vcombine.low %v1383, %v1384
    %v1465 = vunpack.c.l.s4 1983009808
    %v1466 = vunpack.c.0.s8 %v1465
    %v1467 = vlaneseq
    %v1468 = vshrl.u32 %v1467, 7
    %v1469 = vsub.s32 %v1466, %v1468
    %v1470 = vrot.slane %v1463, %v1469
    %v1471 = vcombine.low %v1375, %v1382
    %v1473 = vunpack.c.l.s4 1983009808
    %v1474 = vunpack.c.0.s8 %v1473
    %v1475 = vlaneseq
    %v1476 = vshrl.u32 %v1475, 7
    %v1477 = vsub.s32 %v1474, %v1476
    %v1478 = vrot.slane %v1471, %v1477
    %v1479 = vcombine.low %v1385, %v1386
    %v1481 = vunpack.c.l.s4 1983009808
    %v1482 = vunpack.c.0.s8 %v1481
    %v1483 = vlaneseq
    %v1484 = vshrl.u32 %v1483, 7
    %v1485 = vsub.s32 %v1482, %v1484
    %v1486 = vrot.slane %v1479, %v1485
    %v1487 = vcombine.low %v1462, %v1470
    %v1488 = vcombine.high %v1462, %v1470
    %v1490 = vunpack.c.l.s4 1934713408
    %v1491 = vunpack.c.0.s8 %v1490
    %v1492 = vlaneseq
    %v1493 = vshrl.u32 %v1492, 7
    %v1494 = vsub.s32 %v1491, %v1493
    %v1495 = vrot.slane %v1487, %v1494
    %v1497 = vunpack.c.l.s4 1934713408
    %v1498 = vunpack.c.0.s8 %v1497
    %v1499 = vlaneseq
    %v1500 = vshrl.u32 %v1499, 7
    %v1501 = vsub.s32 %v1498, %v1500
    %v1502 = vrot.slane %v1488, %v1501
    %v1503 = vcombine.low %v1478, %v1486
    %v1504 = vcombine.high %v1478, %v1486
    %v1506 = vunpack.c.l.s4 1934713408
    %v1507 = vunpack.c.0.s8 %v1506
    %v1508 = vlaneseq
    %v1509 = vshrl.u32 %v1508, 7
    %v1510 = vsub.s32 %v1507, %v1509
    %v1511 = vrot.slane %v1503, %v1510
    %v1513 = vunpack.c.l.s4 1934713408
    %v1514 = vunpack.c.0.s8 %v1513
    %v1515 = vlaneseq
    %v1516 = vshrl.u32 %v1515, 7
    %v1517 = vsub.s32 %v1514, %v1516
    %v1518 = vrot.slane %v1504, %v1517
    %v1519 = vcombine.low %v1495, %v1511
    %v1520 = vcombine.high %v1495, %v1511
    %v1521 = vcombine.low %v1502, %v1518
    %v1522 = vcombine.high %v1502, %v1518
    %v1523 = vcombine.low %v1427, %v1434
    %v1525 = vunpack.c.l.s4 1983009808
    %v1526 = vunpack.c.0.s8 %v1525
    %v1527 = vlaneseq
    %v1528 = vshrl.u32 %v1527, 7
    %v1529 = vsub.s32 %v1526, %v1528
    %v1530 = vrot.slane %v1523, %v1529
    %v1531 = vcombine.low %v1451, %v1452
    %v1533 = vunpack.c.l.s4 1983009808
    %v1534 = vunpack.c.0.s8 %v1533
    %v1535 = vlaneseq
    %v1536 = vshrl.u32 %v1535, 7
    %v1537 = vsub.s32 %v1534, %v1536
    %v1538 = vrot.slane %v1531, %v1537
    %v1539 = vcombine.low %v1443, %v1450
    %v1541 = vunpack.c.l.s4 1983009808
    %v1542 = vunpack.c.0.s8 %v1541
    %v1543 = vlaneseq
    %v1544 = vshrl.u32 %v1543, 7
    %v1545 = vsub.s32 %v1542, %v1544
    %v1546 = vrot.slane %v1539, %v1545
    %v1547 = vcombine.low %v1453, %v1454
    %v1549 = vunpack.c.l.s4 1983009808
    %v1550 = vunpack.c.0.s8 %v1549
    %v1551 = vlaneseq
    %v1552 = vshrl.u32 %v1551, 7
    %v1553 = vsub.s32 %v1550, %v1552
    %v1554 = vrot.slane %v1547, %v1553
    %v1555 = vcombine.low %v1530, %v1538
    %v1556 = vcombine.high %v1530, %v1538
    %v1558 = vunpack.c.l.s4 1934713408
    %v1559 = vunpack.c.0.s8 %v1558
    %v1560 = vlaneseq
    %v1561 = vshrl.u32 %v1560, 7
    %v1562 = vsub.s32 %v1559, %v1561
    %v1563 = vrot.slane %v1555, %v1562
    %v1565 = vunpack.c.l.s4 1934713408
    %v1566 = vunpack.c.0.s8 %v1565
    %v1567 = vlaneseq
    %v1568 = vshrl.u32 %v1567, 7
    %v1569 = vsub.s32 %v1566, %v1568
    %v1570 = vrot.slane %v1556, %v1569
    %v1571 = vcombine.low %v1546, %v1554
    %v1572 = vcombine.high %v1546, %v1554
    %v1574 = vunpack.c.l.s4 1934713408
    %v1575 = vunpack.c.0.s8 %v1574
    %v1576 = vlaneseq
    %v1577 = vshrl.u32 %v1576, 7
    %v1578 = vsub.s32 %v1575, %v1577
    %v1579 = vrot.slane %v1571, %v1578
    %v1581 = vunpack.c.l.s4 1934713408
    %v1582 = vunpack.c.0.s8 %v1581
    %v1583 = vlaneseq
    %v1584 = vshrl.u32 %v1583, 7
    %v1585 = vsub.s32 %v1582, %v1584
    %v1586 = vrot.slane %v1572, %v1585
    %v1587 = vcombine.low %v1563, %v1579
    %v1588 = vcombine.high %v1563, %v1579
    %v1589 = vcombine.low %v1570, %v1586
    %v1590 = vcombine.high %v1570, %v1586
    %1593 = vrot.lane.b32.xlu0 %v1520, 32
    %v1594 = vpop.permute.xlu0 %1593
    %1595 = vrot.lane.b32.xlu0 %v1588, 32
    %v1596 = vpop.permute.xlu0 %1595
    %1601 = vrot.lane.b32.xlu0 %v1521, 64
    %v1602 = vpop.permute.xlu0 %1601
    %1603 = vrot.lane.b32.xlu0 %v1589, 64
    %v1604 = vpop.permute.xlu0 %1603
    %1609 = vrot.lane.b32.xlu0 %v1522, 96
    %v1610 = vpop.permute.xlu0 %1609
    %1611 = vrot.lane.b32.xlu0 %v1590, 96
    %v1612 = vpop.permute.xlu0 %1611
    %v1615 = vsel %vm918, %v1519, %v1594
    %v1616 = vsel %vm918, %v1587, %v1596
    %vm1617 = vcmask 523264
    %v1618 = vsel %vm1617, %v1615, %v1602
    %v1619 = vsel %vm1617, %v1616, %v1604
    %vm1620 = vcmask 785408
    %v1621 = vsel %vm1620, %v1618, %v1610
    %v1622 = vsel %vm1620, %v1619, %v1612
    %v1623 = vpack.c.bf16 %v1622, %v1621
    %v1624 = vld [vmem:[%s4] sm:$0xf]
    %v1625 = vld [vmem:[%s4 + $0x4] sm:$0xf]
    %v1626 = vld [vmem:[%s4 + $0x8] sm:$0xf]
    %v1627 = vld [vmem:[%s4 + $0xc] sm:$0xf]
    %v1628 = vld [vmem:[%s4 + $0x10] sm:$0xf]
    %v1629 = vld [vmem:[%s4 + $0x14] sm:$0xf]
    %v1630 = vld [vmem:[%s4 + $0x18] sm:$0xf]
    %v1631 = vld [vmem:[%s4 + $0x1c] sm:$0xf]
    %v1632 = vld [vmem:[%s4 + $0x20] sm:$0xf]
    %v1633 = vld [vmem:[%s4 + $0x24] sm:$0xf]
    %v1634 = vld [vmem:[%s4 + $0x28] sm:$0xf]
    %v1635 = vld [vmem:[%s4 + $0x2c] sm:$0xf]
    %v1636 = vld [vmem:[%s4 + $0x30] sm:$0xf]
    %v1637 = vld [vmem:[%s4 + $0x34] sm:$0xf]
    %v1638 = vld [vmem:[%s4 + $0x38] sm:$0xf]
    %v1639 = vld [vmem:[%s4 + $0x3c] sm:$0xf]
    %v1656 = vunpack.c.l.b16 %v1624
    %v1657 = vunpack.c.l.b16 %v1625
    %v1658 = vunpack.c.l.b16 %v1626
    %v1659 = vunpack.c.l.b16 %v1627
    %v1660 = vunpack.c.l.b16 %v1628
    %v1661 = vunpack.c.l.b16 %v1629
    %v1662 = vunpack.c.l.b16 %v1630
    %v1663 = vunpack.c.l.b16 %v1631
    %v1664 = vunpack.c.l.b16 %v1632
    %v1665 = vunpack.c.l.b16 %v1633
    %v1666 = vunpack.c.l.b16 %v1634
    %v1667 = vunpack.c.l.b16 %v1635
    %v1668 = vunpack.c.l.b16 %v1636
    %v1669 = vunpack.c.l.b16 %v1637
    %v1670 = vunpack.c.l.b16 %v1638
    %v1671 = vunpack.c.l.b16 %v1639
    %v1672 = vpack.c.b16 %v1657, %v1656
    %v1673 = vpack.c.b16 %v1659, %v1658
    %v1674 = vpack.c.b16 %v1661, %v1660
    %v1675 = vpack.c.b16 %v1663, %v1662
    %v1676 = vpack.c.b16 %v1665, %v1664
    %v1677 = vpack.c.b16 %v1667, %v1666
    %v1678 = vpack.c.b16 %v1669, %v1668
    %v1679 = vpack.c.b16 %v1671, %v1670
    %1688 = vmatprep.subr.bf16.mxu0 0
    %1689 = vmatpush1.bf16.msra.mxu0 %v1672
    %1690 = vmatprep.subr.bf16.mxu0 0
    %1691 = vmatpush1.bf16.msra.mxu0 %v1673
    %1692 = vmatprep.subr.bf16.mxu0 0
    %1693 = vmatpush1.bf16.msra.mxu0 %v1674
    %1694 = vmatprep.subr.bf16.mxu0 0
    %1695 = vmatpush1.bf16.msra.mxu0 %v1675
    %1696 = vmatprep.subr.bf16.mxu0 0
    %1697 = vmatpush1.bf16.msra.mxu0 %v1676
    %1698 = vmatprep.subr.bf16.mxu0 0
    %1699 = vmatpush1.bf16.msra.mxu0 %v1677
    %1700 = vmatprep.subr.bf16.mxu0 0
    %1701 = vmatpush1.bf16.msra.mxu0 %v1678
    %1702 = vmatprep.subr.bf16.mxu0 0
    %1703 = vmatpush1.bf16.msra.mxu0 %v1679
    %1704 = vmatprep.subr.bf16.mxu0 0
    %1705 = vmatpush1.bf16.msra.mxu0 0
    %1706 = vmatprep.subr.bf16.mxu0 0
    %1707 = vmatpush1.bf16.msra.mxu0 0
    %1708 = vmatprep.subr.bf16.mxu0 0
    %1709 = vmatpush1.bf16.msra.mxu0 0
    %1710 = vmatprep.subr.bf16.mxu0 0
    %1711 = vmatpush1.bf16.msra.mxu0 0
    %1712 = vmatprep.subr.bf16.mxu0 0
    %1713 = vmatpush1.bf16.msra.mxu0 0
    %1714 = vmatprep.subr.bf16.mxu0 0
    %1715 = vmatpush1.bf16.msra.mxu0 0
    %1716 = vmatprep.subr.bf16.mxu0 0
    %1717 = vmatpush1.bf16.msra.mxu0 0
    %1718 = vmatprep.subr.bf16.mxu0 0
    %1719 = vmatpush1.bf16.msra.mxu0 0
    %1720 = vmatprep.mubr.bf16.mxu0 0
    %1721 = vmatmul.mubr.bf16.gmra.mrb[0].mxu0 %v1623
    %v1722 = vpop.f32.mrb[0].mxu0
    %v1723 = vadd.f32 0.0, %v1722
    %v1724 = vpop.f32.mrb[0].mxu0
    %v1725 = vpop.f32.mrb[0].mxu0
    %v1726 = vadd.f32 0.0, %v1725
    %v1727 = vpop.f32.mrb[0].mxu0
    %1728 = vdwg.mxu0
    %1729 = vst [vmem:[#allocation2] sm:$0xff] %v1723
    %1730 = vst [vmem:[#allocation2 + $0x8] sm:$0xff] %v1726
    // Predicated region
    $region22: #{llama_attention.1} parent=1 // pred_check
      _
    $region23: #{llama_attention.1} parent=1 // pred_check_branch
      %1732 = sbr.rel (0) target = $region25
    $region24: #{llama_attention.1} parent=1 // pred_region
      %s1734 = ssub.s32 256, 256
      %1735 = vsyncadd [#allocation3], %s1734
      %s1736 = sshll.u32 [#allocation2], 4
      %s1737 = int_to_ptr.vmem [resolvable:$true] %s1736
      %1742 = dma.vmem_to_hbm [thread:$0]  %s1737, 256, %s5, [#allocation3], 128, 128, 8
    $region25: #{llama_attention.1} parent=1 // pred_fallthru
      _
    // Predicated region
    $region26: #{llama_attention.1} parent=1 // pred_check
      _
    $region27: #{llama_attention.1} parent=1 // pred_check_branch
      %1744 = sbr.rel (0) target = $region29
    $region28: #{llama_attention.1} parent=1 // pred_region
      %1745 = dma.done [#allocation3], 256
    $region29: #{llama_attention.1} parent=1 // pred_fallthru
      _
    %1746 = vsyncpa [#allocation3], 1

</llo_original>
